<compile_context>
chip_gen: v7x
topology: tpu7x:2x2x1
jax: 0.10.0
libtpu: 0.0.40
codegen_flags: <defaults>
</compile_context>

<pallas_src>
import jax
import jax.numpy as jnp
from jax import lax
from jax.experimental import pallas as pl
from jax.experimental.pallas import tpu as pltpu


def _round_up(x, m):
    return (x + m - 1) // m * m


def _patch_embed_kernel(x_ref, w_ref, b_ref, o_ref):
    # x_ref: (1, C, 1, P, Wp, P)  f32   -- one (batch, patch-row) strip, NCHW order
    # w_ref: (C, P, P, Ep)        bf16  -- conv weight as (c, kh, kw, e), VMEM-resident
    # b_ref: (1, Ep)              f32   -- bias, VMEM-resident
    # o_ref: (1, 1, Wp, Ep)       out_dtype
    C, P = w_ref.shape[0], w_ref.shape[1]
    Wp = x_ref.shape[4]
    Ep = w_ref.shape[3]

    acc = jnp.zeros((Wp, Ep), jnp.float32)
    # Static (small) unroll over the (c, kh) reduction slices: each is a
    # [Wp, P] x [P, Ep] MXU matmul with an f32 accumulator — no transposes needed
    # because the weight was pre-laid-out as (c, kh, kw, e).
    for c in range(C):
        for kh in range(P):
            lhs = x_ref[0, c, 0, kh].astype(jnp.bfloat16)        # [Wp, P]
            acc = acc + jnp.dot(lhs, w_ref[c, kh],
                                preferred_element_type=jnp.float32)
    # Bias add in f32 (VPU), single cast at the store.
    o_ref[0, 0] = (acc + b_ref[...]).astype(o_ref.dtype)


def patch_embed(x, weight, bias, patch_size, *, out_dtype=None):
    """x: [B, C, H, W] (NCHW), weight: [E, C, P, P], bias: [E] -> [B, Np, E]."""
    B, C, H, W = x.shape
    E = weight.shape[0]
    P = patch_size
    Hp, Wp = H // P, W // P
    Np = Hp * Wp
    K = C * P * P
    out_dtype = x.dtype if out_dtype is None else out_dtype

    # Drop any remainder rows/cols (same semantics as the strided conv), then split
    # H -> (Hp, P) and W -> (Wp, P).  Both are contiguous-axis splits: pure metadata
    # reshapes — the old host-side im2col HBM round trip is eliminated.
    if H != Hp * P or W != Wp * P:
        x = x[:, :, :Hp * P, :Wp * P]
    x6 = x.reshape(B, C, Hp, P, Wp, P)

    # Pad only the embedding dim (to a multiple of 128) so output stores are
    # lane-dense.  K and M are never padded (the fused reduction is exactly C*P*P).
    Ep = _round_up(E, 128)

    # Conv weight [E, C, kh, kw] -> [C, kh, kw, E] (bf16, + E pad if needed).
    w_r = weight.transpose(1, 2, 3, 0).astype(jnp.bfloat16)
    b_r = bias.astype(jnp.float32).reshape(1, E)
    if Ep != E:
        w_r = jnp.pad(w_r, ((0, 0), (0, 0), (0, 0), (0, Ep - E)))
        b_r = jnp.pad(b_r, ((0, 0), (0, Ep - E)))

    itemsize_out = jnp.dtype(out_dtype).itemsize
    cost = pl.CostEstimate(
        flops=2 * B * Np * K * Ep,
        transcendentals=0,
        bytes_accessed=(B * C * Hp * P * Wp * P * x.dtype.itemsize   # x (read once)
                        + K * Ep * 2 + Ep * 4                        # weight + bias
                        + B * Np * Ep * itemsize_out),               # output
    )

    out = pl.pallas_call(
        _patch_embed_kernel,
        out_shape=jax.ShapeDtypeStruct((B, Hp, Wp, Ep), out_dtype),
        grid_spec=pltpu.PrefetchScalarGridSpec(
            num_scalar_prefetch=0,
            grid=(B, Hp),
            in_specs=[
                # One (batch, patch-row) strip of the NCHW input per grid step.
                pl.BlockSpec((1, C, 1, P, Wp, P),
                             lambda b, h: (b, 0, h, 0, 0, 0)),
                # Weight / bias: constant block index -> fetched once, VMEM-resident.
                # TODO(synk): pipeline_mode=pl.Buffered(1) would drop their redundant
                # second buffer; skipped because the resident blocks are only KiB here.
                pl.BlockSpec((C, P, P, Ep), lambda b, h: (0, 0, 0, 0)),
                pl.BlockSpec((1, Ep), lambda b, h: (0, 0)),
            ],
            out_specs=pl.BlockSpec((1, 1, Wp, Ep), lambda b, h: (b, h, 0, 0)),
        ),
        compiler_params=pltpu.CompilerParams(
            # Both grid axes are independent output tiles -> megacore split on v7x.
            dimension_semantics=("parallel", "parallel"),
            # No vmem_limit_bytes: default scoped VMEM covers the small per-step
            # working set; never request v7x's full 64 MiB physical VMEM.
        ),
        cost_estimate=cost,
    )(x6, w_r, b_r)

    # Strip the E padding (if any) and flatten patches: [B, Hp, Wp, E] -> [B, Np, E]
    # (== torch: conv -> flatten(2) -> transpose(1, 2)).  Free reshape under jit.
    if Ep != E:
        out = out[..., :E]
    return out.reshape(B, Np, E)


def _reference(x, weight, bias, patch_size, *, cast_bf16=True):
    # Pure-JAX reference: strided conv (NCHW / OIHW) then flatten(2).transpose(1,2).
    # cast_bf16=True quantizes the inputs exactly like the kernel path so the
    # comparison isolates kernel correctness from bf16 input rounding.
    xr, wr = x, weight
    if cast_bf16:
        xr = x.astype(jnp.bfloat16)
        wr = weight.astype(jnp.bfloat16)
    y = lax.conv_general_dilated(
        xr, wr,
        window_strides=(patch_size, patch_size),
        padding="VALID",
        dimension_numbers=("NCHW", "OIHW", "NCHW"),
        preferred_element_type=jnp.float32,
    )
    y = y + bias.reshape(1, -1, 1, 1).astype(jnp.float32)
    B, E, Hp, Wp = y.shape
    return y.reshape(B, E, Hp * Wp).transpose(0, 2, 1)


if __name__ == "__main__":
    # Small shapes consistent with the module (patch_size divides H, W).
    B, C, H, W = 2, 4, 16, 16
    P, E = 4, 32

    key = jax.random.PRNGKey(0)
    kx, kw, kb = jax.random.split(key, 3)

    x = jax.random.normal(kx, (B, C, H, W), dtype=jnp.float32)
    # Deterministic conv-like parameter init (fan_in-scaled, as torch's default).
    fan_in = C * P * P
    bound = 1.0 / (fan_in ** 0.5)
    weight = jax.random.uniform(kw, (E, C, P, P), minval=-bound, maxval=bound,
                                dtype=jnp.float32)
    bias = jax.random.uniform(kb, (E,), minval=-bound, maxval=bound,
                              dtype=jnp.float32)

    # jit the wrapper so the (tiny) remaining glue fuses into single HBM passes.
    fn = jax.jit(patch_embed, static_argnames=("patch_size", "out_dtype"))

    out = jax.block_until_ready(fn(x, weight, bias, patch_size=P))
    assert out.shape == (B, (H // P) * (W // P), E), out.shape
    assert out.dtype == x.dtype

    # Tight check vs a reference using the same bf16-quantized inputs + f32 accum.
    ref_bf = _reference(x, weight, bias, P, cast_bf16=True)
    assert jnp.allclose(out, ref_bf, atol=1e-3, rtol=1e-3), "mismatch vs bf16 reference"

    # Sanity check vs the full-f32 reference (tolerance accounts for bf16 inputs).
    ref_f32 = _reference(x, weight, bias, P, cast_bf16=False)
    assert jnp.allclose(out, ref_f32, atol=3e-2, rtol=3e-2), "mismatch vs f32 reference"

    # Exercise the bf16-output path (halves output HBM writes for bf16 consumers).
    out_bf16 = jax.block_until_ready(
        fn(x, weight, bias, patch_size=P, out_dtype=jnp.bfloat16))
    assert out_bf16.dtype == jnp.bfloat16
    assert jnp.allclose(out_bf16.astype(jnp.float32), ref_bf, atol=2e-2, rtol=2e-2), \
        "mismatch vs bf16 reference (bf16 output path)"

    print("KERNEL_OK")
</pallas_src>

<mosaic_0001>
module attributes {stable_mosaic.version = 11 : i64} {
  func.func @_patch_embed_kernel(%arg0: i32, %arg1: i32, %arg2: memref<1x4x1x4x4x4xf32, #tpu.memory_space<vmem>>, %arg3: memref<4x4x4x128xbf16, #tpu.memory_space<vmem>>, %arg4: memref<1x128xf32, #tpu.memory_space<vmem>>, %arg5: memref<1x1x4x128xf32, #tpu.memory_space<vmem>>) attributes {dimension_semantics = [#tpu.dimension_semantics<parallel>, #tpu.dimension_semantics<parallel>], iteration_bounds = array<i64: 2, 4>, scalar_prefetch = 0 : i64, scratch_operands = 0 : i64, tpu.core_type = #tpu.core_type<tc>, window_params = [{transform_indices = @transform_0, window_bounds = array<i64: 1, 4, 1, 4, 4, 4>}, {pipeline_mode = #tpu.pipeline_mode<synchronous>, transform_indices = @transform_1, window_bounds = array<i64: 4, 4, 4, 128>}, {pipeline_mode = #tpu.pipeline_mode<synchronous>, transform_indices = @transform_2, window_bounds = array<i64: 1, 128>}, {transform_indices = @transform_3, window_bounds = array<i64: 1, 1, 4, 128>}]} {
    %cst = arith.constant 0.000000e+00 : f32
    %0 = vector.broadcast %cst : f32 to vector<4x128xf32>
    %c0 = arith.constant 0 : index
    %c0_0 = arith.constant 0 : index
    %c0_1 = arith.constant 0 : index
    %c0_2 = arith.constant 0 : index
    %c0_3 = arith.constant 0 : index
    %c0_4 = arith.constant 0 : index
    %1 = vector.load %arg2[%c0, %c0_0, %c0_1, %c0_2, %c0_3, %c0_4] : memref<1x4x1x4x4x4xf32, #tpu.memory_space<vmem>>, vector<1x1x1x1x4x4xf32>
    %2 = vector.shape_cast %1 : vector<1x1x1x1x4x4xf32> to vector<4x4xf32>
    %3 = arith.truncf %2 : vector<4x4xf32> to vector<4x4xbf16>
    %c0_5 = arith.constant 0 : index
    %c0_6 = arith.constant 0 : index
    %c0_7 = arith.constant 0 : index
    %c0_8 = arith.constant 0 : index
    %4 = vector.load %arg3[%c0_5, %c0_6, %c0_7, %c0_8] : memref<4x4x4x128xbf16, #tpu.memory_space<vmem>>, vector<1x1x4x128xbf16>
    %5 = vector.shape_cast %4 : vector<1x1x4x128xbf16> to vector<4x128xbf16>
    %cst_9 = arith.constant dense<0.000000e+00> : vector<4x128xf32>
    %6 = tpu.matmul %3, %5, %cst_9 {dimension_numbers = #tpu.dot_dimension_numbers<[1], [0], [0], [1], [0, 0, 1, 1], [], []>} : vector<4x4xbf16>, vector<4x128xbf16>, vector<4x128xf32> -> vector<4x128xf32>
    %7 = arith.addf %0, %6 : vector<4x128xf32>
    %c0_10 = arith.constant 0 : index
    %c0_11 = arith.constant 0 : index
    %c0_12 = arith.constant 0 : index
    %c1 = arith.constant 1 : index
    %c0_13 = arith.constant 0 : index
    %c0_14 = arith.constant 0 : index
    %8 = vector.load %arg2[%c0_10, %c0_11, %c0_12, %c1, %c0_13, %c0_14] : memref<1x4x1x4x4x4xf32, #tpu.memory_space<vmem>>, vector<1x1x1x1x4x4xf32>
    %9 = vector.shape_cast %8 : vector<1x1x1x1x4x4xf32> to vector<4x4xf32>
    %10 = arith.truncf %9 : vector<4x4xf32> to vector<4x4xbf16>
    %c0_15 = arith.constant 0 : index
    %c1_16 = arith.constant 1 : index
    %c0_17 = arith.constant 0 : index
    %c0_18 = arith.constant 0 : index
    %11 = vector.load %arg3[%c0_15, %c1_16, %c0_17, %c0_18] : memref<4x4x4x128xbf16, #tpu.memory_space<vmem>>, vector<1x1x4x128xbf16>
    %12 = vector.shape_cast %11 : vector<1x1x4x128xbf16> to vector<4x128xbf16>
    %cst_19 = arith.constant dense<0.000000e+00> : vector<4x128xf32>
    %13 = tpu.matmul %10, %12, %cst_19 {dimension_numbers = #tpu.dot_dimension_numbers<[1], [0], [0], [1], [0, 0, 1, 1], [], []>} : vector<4x4xbf16>, vector<4x128xbf16>, vector<4x128xf32> -> vector<4x128xf32>
    %14 = arith.addf %7, %13 : vector<4x128xf32>
    %c0_20 = arith.constant 0 : index
    %c0_21 = arith.constant 0 : index
    %c0_22 = arith.constant 0 : index
    %c2 = arith.constant 2 : index
    %c0_23 = arith.constant 0 : index
    %c0_24 = arith.constant 0 : index
    %15 = vector.load %arg2[%c0_20, %c0_21, %c0_22, %c2, %c0_23, %c0_24] : memref<1x4x1x4x4x4xf32, #tpu.memory_space<vmem>>, vector<1x1x1x1x4x4xf32>
    %16 = vector.shape_cast %15 : vector<1x1x1x1x4x4xf32> to vector<4x4xf32>
    %17 = arith.truncf %16 : vector<4x4xf32> to vector<4x4xbf16>
    %c0_25 = arith.constant 0 : index
    %c2_26 = arith.constant 2 : index
    %c0_27 = arith.constant 0 : index
    %c0_28 = arith.constant 0 : index
    %18 = vector.load %arg3[%c0_25, %c2_26, %c0_27, %c0_28] : memref<4x4x4x128xbf16, #tpu.memory_space<vmem>>, vector<1x1x4x128xbf16>
    %19 = vector.shape_cast %18 : vector<1x1x4x128xbf16> to vector<4x128xbf16>
    %cst_29 = arith.constant dense<0.000000e+00> : vector<4x128xf32>
    %20 = tpu.matmul %17, %19, %cst_29 {dimension_numbers = #tpu.dot_dimension_numbers<[1], [0], [0], [1], [0, 0, 1, 1], [], []>} : vector<4x4xbf16>, vector<4x128xbf16>, vector<4x128xf32> -> vector<4x128xf32>
    %21 = arith.addf %14, %20 : vector<4x128xf32>
    %c0_30 = arith.constant 0 : index
    %c0_31 = arith.constant 0 : index
    %c0_32 = arith.constant 0 : index
    %c3 = arith.constant 3 : index
    %c0_33 = arith.constant 0 : index
    %c0_34 = arith.constant 0 : index
    %22 = vector.load %arg2[%c0_30, %c0_31, %c0_32, %c3, %c0_33, %c0_34] : memref<1x4x1x4x4x4xf32, #tpu.memory_space<vmem>>, vector<1x1x1x1x4x4xf32>
    %23 = vector.shape_cast %22 : vector<1x1x1x1x4x4xf32> to vector<4x4xf32>
    %24 = arith.truncf %23 : vector<4x4xf32> to vector<4x4xbf16>
    %c0_35 = arith.constant 0 : index
    %c3_36 = arith.constant 3 : index
    %c0_37 = arith.constant 0 : index
    %c0_38 = arith.constant 0 : index
    %25 = vector.load %arg3[%c0_35, %c3_36, %c0_37, %c0_38] : memref<4x4x4x128xbf16, #tpu.memory_space<vmem>>, vector<1x1x4x128xbf16>
    %26 = vector.shape_cast %25 : vector<1x1x4x128xbf16> to vector<4x128xbf16>
    %cst_39 = arith.constant dense<0.000000e+00> : vector<4x128xf32>
    %27 = tpu.matmul %24, %26, %cst_39 {dimension_numbers = #tpu.dot_dimension_numbers<[1], [0], [0], [1], [0, 0, 1, 1], [], []>} : vector<4x4xbf16>, vector<4x128xbf16>, vector<4x128xf32> -> vector<4x128xf32>
    %28 = arith.addf %21, %27 : vector<4x128xf32>
    %c0_40 = arith.constant 0 : index
    %c1_41 = arith.constant 1 : index
    %c0_42 = arith.constant 0 : index
    %c0_43 = arith.constant 0 : index
    %c0_44 = arith.constant 0 : index
    %c0_45 = arith.constant 0 : index
    %29 = vector.load %arg2[%c0_40, %c1_41, %c0_42, %c0_43, %c0_44, %c0_45] : memref<1x4x1x4x4x4xf32, #tpu.memory_space<vmem>>, vector<1x1x1x1x4x4xf32>
    %30 = vector.shape_cast %29 : vector<1x1x1x1x4x4xf32> to vector<4x4xf32>
    %31 = arith.truncf %30 : vector<4x4xf32> to vector<4x4xbf16>
    %c1_46 = arith.constant 1 : index
    %c0_47 = arith.constant 0 : index
    %c0_48 = arith.constant 0 : index
    %c0_49 = arith.constant 0 : index
    %32 = vector.load %arg3[%c1_46, %c0_47, %c0_48, %c0_49] : memref<4x4x4x128xbf16, #tpu.memory_space<vmem>>, vector<1x1x4x128xbf16>
    %33 = vector.shape_cast %32 : vector<1x1x4x128xbf16> to vector<4x128xbf16>
    %cst_50 = arith.constant dense<0.000000e+00> : vector<4x128xf32>
    %34 = tpu.matmul %31, %33, %cst_50 {dimension_numbers = #tpu.dot_dimension_numbers<[1], [0], [0], [1], [0, 0, 1, 1], [], []>} : vector<4x4xbf16>, vector<4x128xbf16>, vector<4x128xf32> -> vector<4x128xf32>
    %35 = arith.addf %28, %34 : vector<4x128xf32>
    %c0_51 = arith.constant 0 : index
    %c1_52 = arith.constant 1 : index
    %c0_53 = arith.constant 0 : index
    %c1_54 = arith.constant 1 : index
    %c0_55 = arith.constant 0 : index
    %c0_56 = arith.constant 0 : index
    %36 = vector.load %arg2[%c0_51, %c1_52, %c0_53, %c1_54, %c0_55, %c0_56] : memref<1x4x1x4x4x4xf32, #tpu.memory_space<vmem>>, vector<1x1x1x1x4x4xf32>
    %37 = vector.shape_cast %36 : vector<1x1x1x1x4x4xf32> to vector<4x4xf32>
    %38 = arith.truncf %37 : vector<4x4xf32> to vector<4x4xbf16>
    %c1_57 = arith.constant 1 : index
    %c1_58 = arith.constant 1 : index
    %c0_59 = arith.constant 0 : index
    %c0_60 = arith.constant 0 : index
    %39 = vector.load %arg3[%c1_57, %c1_58, %c0_59, %c0_60] : memref<4x4x4x128xbf16, #tpu.memory_space<vmem>>, vector<1x1x4x128xbf16>
    %40 = vector.shape_cast %39 : vector<1x1x4x128xbf16> to vector<4x128xbf16>
    %cst_61 = arith.constant dense<0.000000e+00> : vector<4x128xf32>
    %41 = tpu.matmul %38, %40, %cst_61 {dimension_numbers = #tpu.dot_dimension_numbers<[1], [0], [0], [1], [0, 0, 1, 1], [], []>} : vector<4x4xbf16>, vector<4x128xbf16>, vector<4x128xf32> -> vector<4x128xf32>
    %42 = arith.addf %35, %41 : vector<4x128xf32>
    %c0_62 = arith.constant 0 : index
    %c1_63 = arith.constant 1 : index
    %c0_64 = arith.constant 0 : index
    %c2_65 = arith.constant 2 : index
    %c0_66 = arith.constant 0 : index
    %c0_67 = arith.constant 0 : index
    %43 = vector.load %arg2[%c0_62, %c1_63, %c0_64, %c2_65, %c0_66, %c0_67] : memref<1x4x1x4x4x4xf32, #tpu.memory_space<vmem>>, vector<1x1x1x1x4x4xf32>
    %44 = vector.shape_cast %43 : vector<1x1x1x1x4x4xf32> to vector<4x4xf32>
    %45 = arith.truncf %44 : vector<4x4xf32> to vector<4x4xbf16>
    %c1_68 = arith.constant 1 : index
    %c2_69 = arith.constant 2 : index
    %c0_70 = arith.constant 0 : index
    %c0_71 = arith.constant 0 : index
    %46 = vector.load %arg3[%c1_68, %c2_69, %c0_70, %c0_71] : memref<4x4x4x128xbf16, #tpu.memory_space<vmem>>, vector<1x1x4x128xbf16>
    %47 = vector.shape_cast %46 : vector<1x1x4x128xbf16> to vector<4x128xbf16>
    %cst_72 = arith.constant dense<0.000000e+00> : vector<4x128xf32>
    %48 = tpu.matmul %45, %47, %cst_72 {dimension_numbers = #tpu.dot_dimension_numbers<[1], [0], [0], [1], [0, 0, 1, 1], [], []>} : vector<4x4xbf16>, vector<4x128xbf16>, vector<4x128xf32> -> vector<4x128xf32>
    %49 = arith.addf %42, %48 : vector<4x128xf32>
    %c0_73 = arith.constant 0 : index
    %c1_74 = arith.constant 1 : index
    %c0_75 = arith.constant 0 : index
    %c3_76 = arith.constant 3 : index
    %c0_77 = arith.constant 0 : index
    %c0_78 = arith.constant 0 : index
    %50 = vector.load %arg2[%c0_73, %c1_74, %c0_75, %c3_76, %c0_77, %c0_78] : memref<1x4x1x4x4x4xf32, #tpu.memory_space<vmem>>, vector<1x1x1x1x4x4xf32>
    %51 = vector.shape_cast %50 : vector<1x1x1x1x4x4xf32> to vector<4x4xf32>
    %52 = arith.truncf %51 : vector<4x4xf32> to vector<4x4xbf16>
    %c1_79 = arith.constant 1 : index
    %c3_80 = arith.constant 3 : index
    %c0_81 = arith.constant 0 : index
    %c0_82 = arith.constant 0 : index
    %53 = vector.load %arg3[%c1_79, %c3_80, %c0_81, %c0_82] : memref<4x4x4x128xbf16, #tpu.memory_space<vmem>>, vector<1x1x4x128xbf16>
    %54 = vector.shape_cast %53 : vector<1x1x4x128xbf16> to vector<4x128xbf16>
    %cst_83 = arith.constant dense<0.000000e+00> : vector<4x128xf32>
    %55 = tpu.matmul %52, %54, %cst_83 {dimension_numbers = #tpu.dot_dimension_numbers<[1], [0], [0], [1], [0, 0, 1, 1], [], []>} : vector<4x4xbf16>, vector<4x128xbf16>, vector<4x128xf32> -> vector<4x128xf32>
    %56 = arith.addf %49, %55 : vector<4x128xf32>
    %c0_84 = arith.constant 0 : index
    %c2_85 = arith.constant 2 : index
    %c0_86 = arith.constant 0 : index
    %c0_87 = arith.constant 0 : index
    %c0_88 = arith.constant 0 : index
    %c0_89 = arith.constant 0 : index
    %57 = vector.load %arg2[%c0_84, %c2_85, %c0_86, %c0_87, %c0_88, %c0_89] : memref<1x4x1x4x4x4xf32, #tpu.memory_space<vmem>>, vector<1x1x1x1x4x4xf32>
    %58 = vector.shape_cast %57 : vector<1x1x1x1x4x4xf32> to vector<4x4xf32>
    %59 = arith.truncf %58 : vector<4x4xf32> to vector<4x4xbf16>
    %c2_90 = arith.constant 2 : index
    %c0_91 = arith.constant 0 : index
    %c0_92 = arith.constant 0 : index
    %c0_93 = arith.constant 0 : index
    %60 = vector.load %arg3[%c2_90, %c0_91, %c0_92, %c0_93] : memref<4x4x4x128xbf16, #tpu.memory_space<vmem>>, vector<1x1x4x128xbf16>
    %61 = vector.shape_cast %60 : vector<1x1x4x128xbf16> to vector<4x128xbf16>
    %cst_94 = arith.constant dense<0.000000e+00> : vector<4x128xf32>
    %62 = tpu.matmul %59, %61, %cst_94 {dimension_numbers = #tpu.dot_dimension_numbers<[1], [0], [0], [1], [0, 0, 1, 1], [], []>} : vector<4x4xbf16>, vector<4x128xbf16>, vector<4x128xf32> -> vector<4x128xf32>
    %63 = arith.addf %56, %62 : vector<4x128xf32>
    %c0_95 = arith.constant 0 : index
    %c2_96 = arith.constant 2 : index
    %c0_97 = arith.constant 0 : index
    %c1_98 = arith.constant 1 : index
    %c0_99 = arith.constant 0 : index
    %c0_100 = arith.constant 0 : index
    %64 = vector.load %arg2[%c0_95, %c2_96, %c0_97, %c1_98, %c0_99, %c0_100] : memref<1x4x1x4x4x4xf32, #tpu.memory_space<vmem>>, vector<1x1x1x1x4x4xf32>
    %65 = vector.shape_cast %64 : vector<1x1x1x1x4x4xf32> to vector<4x4xf32>
    %66 = arith.truncf %65 : vector<4x4xf32> to vector<4x4xbf16>
    %c2_101 = arith.constant 2 : index
    %c1_102 = arith.constant 1 : index
    %c0_103 = arith.constant 0 : index
    %c0_104 = arith.constant 0 : index
    %67 = vector.load %arg3[%c2_101, %c1_102, %c0_103, %c0_104] : memref<4x4x4x128xbf16, #tpu.memory_space<vmem>>, vector<1x1x4x128xbf16>
    %68 = vector.shape_cast %67 : vector<1x1x4x128xbf16> to vector<4x128xbf16>
    %cst_105 = arith.constant dense<0.000000e+00> : vector<4x128xf32>
    %69 = tpu.matmul %66, %68, %cst_105 {dimension_numbers = #tpu.dot_dimension_numbers<[1], [0], [0], [1], [0, 0, 1, 1], [], []>} : vector<4x4xbf16>, vector<4x128xbf16>, vector<4x128xf32> -> vector<4x128xf32>
    %70 = arith.addf %63, %69 : vector<4x128xf32>
    %c0_106 = arith.constant 0 : index
    %c2_107 = arith.constant 2 : index
    %c0_108 = arith.constant 0 : index
    %c2_109 = arith.constant 2 : index
    %c0_110 = arith.constant 0 : index
    %c0_111 = arith.constant 0 : index
    %71 = vector.load %arg2[%c0_106, %c2_107, %c0_108, %c2_109, %c0_110, %c0_111] : memref<1x4x1x4x4x4xf32, #tpu.memory_space<vmem>>, vector<1x1x1x1x4x4xf32>
    %72 = vector.shape_cast %71 : vector<1x1x1x1x4x4xf32> to vector<4x4xf32>
    %73 = arith.truncf %72 : vector<4x4xf32> to vector<4x4xbf16>
    %c2_112 = arith.constant 2 : index
    %c2_113 = arith.constant 2 : index
    %c0_114 = arith.constant 0 : index
    %c0_115 = arith.constant 0 : index
    %74 = vector.load %arg3[%c2_112, %c2_113, %c0_114, %c0_115] : memref<4x4x4x128xbf16, #tpu.memory_space<vmem>>, vector<1x1x4x128xbf16>
    %75 = vector.shape_cast %74 : vector<1x1x4x128xbf16> to vector<4x128xbf16>
    %cst_116 = arith.constant dense<0.000000e+00> : vector<4x128xf32>
    %76 = tpu.matmul %73, %75, %cst_116 {dimension_numbers = #tpu.dot_dimension_numbers<[1], [0], [0], [1], [0, 0, 1, 1], [], []>} : vector<4x4xbf16>, vector<4x128xbf16>, vector<4x128xf32> -> vector<4x128xf32>
    %77 = arith.addf %70, %76 : vector<4x128xf32>
    %c0_117 = arith.constant 0 : index
    %c2_118 = arith.constant 2 : index
    %c0_119 = arith.constant 0 : index
    %c3_120 = arith.constant 3 : index
    %c0_121 = arith.constant 0 : index
    %c0_122 = arith.constant 0 : index
    %78 = vector.load %arg2[%c0_117, %c2_118, %c0_119, %c3_120, %c0_121, %c0_122] : memref<1x4x1x4x4x4xf32, #tpu.memory_space<vmem>>, vector<1x1x1x1x4x4xf32>
    %79 = vector.shape_cast %78 : vector<1x1x1x1x4x4xf32> to vector<4x4xf32>
    %80 = arith.truncf %79 : vector<4x4xf32> to vector<4x4xbf16>
    %c2_123 = arith.constant 2 : index
    %c3_124 = arith.constant 3 : index
    %c0_125 = arith.constant 0 : index
    %c0_126 = arith.constant 0 : index
    %81 = vector.load %arg3[%c2_123, %c3_124, %c0_125, %c0_126] : memref<4x4x4x128xbf16, #tpu.memory_space<vmem>>, vector<1x1x4x128xbf16>
    %82 = vector.shape_cast %81 : vector<1x1x4x128xbf16> to vector<4x128xbf16>
    %cst_127 = arith.constant dense<0.000000e+00> : vector<4x128xf32>
    %83 = tpu.matmul %80, %82, %cst_127 {dimension_numbers = #tpu.dot_dimension_numbers<[1], [0], [0], [1], [0, 0, 1, 1], [], []>} : vector<4x4xbf16>, vector<4x128xbf16>, vector<4x128xf32> -> vector<4x128xf32>
    %84 = arith.addf %77, %83 : vector<4x128xf32>
    %c0_128 = arith.constant 0 : index
    %c3_129 = arith.constant 3 : index
    %c0_130 = arith.constant 0 : index
    %c0_131 = arith.constant 0 : index
    %c0_132 = arith.constant 0 : index
    %c0_133 = arith.constant 0 : index
    %85 = vector.load %arg2[%c0_128, %c3_129, %c0_130, %c0_131, %c0_132, %c0_133] : memref<1x4x1x4x4x4xf32, #tpu.memory_space<vmem>>, vector<1x1x1x1x4x4xf32>
    %86 = vector.shape_cast %85 : vector<1x1x1x1x4x4xf32> to vector<4x4xf32>
    %87 = arith.truncf %86 : vector<4x4xf32> to vector<4x4xbf16>
    %c3_134 = arith.constant 3 : index
    %c0_135 = arith.constant 0 : index
    %c0_136 = arith.constant 0 : index
    %c0_137 = arith.constant 0 : index
    %88 = vector.load %arg3[%c3_134, %c0_135, %c0_136, %c0_137] : memref<4x4x4x128xbf16, #tpu.memory_space<vmem>>, vector<1x1x4x128xbf16>
    %89 = vector.shape_cast %88 : vector<1x1x4x128xbf16> to vector<4x128xbf16>
    %cst_138 = arith.constant dense<0.000000e+00> : vector<4x128xf32>
    %90 = tpu.matmul %87, %89, %cst_138 {dimension_numbers = #tpu.dot_dimension_numbers<[1], [0], [0], [1], [0, 0, 1, 1], [], []>} : vector<4x4xbf16>, vector<4x128xbf16>, vector<4x128xf32> -> vector<4x128xf32>
    %91 = arith.addf %84, %90 : vector<4x128xf32>
    %c0_139 = arith.constant 0 : index
    %c3_140 = arith.constant 3 : index
    %c0_141 = arith.constant 0 : index
    %c1_142 = arith.constant 1 : index
    %c0_143 = arith.constant 0 : index
    %c0_144 = arith.constant 0 : index
    %92 = vector.load %arg2[%c0_139, %c3_140, %c0_141, %c1_142, %c0_143, %c0_144] : memref<1x4x1x4x4x4xf32, #tpu.memory_space<vmem>>, vector<1x1x1x1x4x4xf32>
    %93 = vector.shape_cast %92 : vector<1x1x1x1x4x4xf32> to vector<4x4xf32>
    %94 = arith.truncf %93 : vector<4x4xf32> to vector<4x4xbf16>
    %c3_145 = arith.constant 3 : index
    %c1_146 = arith.constant 1 : index
    %c0_147 = arith.constant 0 : index
    %c0_148 = arith.constant 0 : index
    %95 = vector.load %arg3[%c3_145, %c1_146, %c0_147, %c0_148] : memref<4x4x4x128xbf16, #tpu.memory_space<vmem>>, vector<1x1x4x128xbf16>
    %96 = vector.shape_cast %95 : vector<1x1x4x128xbf16> to vector<4x128xbf16>
    %cst_149 = arith.constant dense<0.000000e+00> : vector<4x128xf32>
    %97 = tpu.matmul %94, %96, %cst_149 {dimension_numbers = #tpu.dot_dimension_numbers<[1], [0], [0], [1], [0, 0, 1, 1], [], []>} : vector<4x4xbf16>, vector<4x128xbf16>, vector<4x128xf32> -> vector<4x128xf32>
    %98 = arith.addf %91, %97 : vector<4x128xf32>
    %c0_150 = arith.constant 0 : index
    %c3_151 = arith.constant 3 : index
    %c0_152 = arith.constant 0 : index
    %c2_153 = arith.constant 2 : index
    %c0_154 = arith.constant 0 : index
    %c0_155 = arith.constant 0 : index
    %99 = vector.load %arg2[%c0_150, %c3_151, %c0_152, %c2_153, %c0_154, %c0_155] : memref<1x4x1x4x4x4xf32, #tpu.memory_space<vmem>>, vector<1x1x1x1x4x4xf32>
    %100 = vector.shape_cast %99 : vector<1x1x1x1x4x4xf32> to vector<4x4xf32>
    %101 = arith.truncf %100 : vector<4x4xf32> to vector<4x4xbf16>
    %c3_156 = arith.constant 3 : index
    %c2_157 = arith.constant 2 : index
    %c0_158 = arith.constant 0 : index
    %c0_159 = arith.constant 0 : index
    %102 = vector.load %arg3[%c3_156, %c2_157, %c0_158, %c0_159] : memref<4x4x4x128xbf16, #tpu.memory_space<vmem>>, vector<1x1x4x128xbf16>
    %103 = vector.shape_cast %102 : vector<1x1x4x128xbf16> to vector<4x128xbf16>
    %cst_160 = arith.constant dense<0.000000e+00> : vector<4x128xf32>
    %104 = tpu.matmul %101, %103, %cst_160 {dimension_numbers = #tpu.dot_dimension_numbers<[1], [0], [0], [1], [0, 0, 1, 1], [], []>} : vector<4x4xbf16>, vector<4x128xbf16>, vector<4x128xf32> -> vector<4x128xf32>
    %105 = arith.addf %98, %104 : vector<4x128xf32>
    %c0_161 = arith.constant 0 : index
    %c3_162 = arith.constant 3 : index
    %c0_163 = arith.constant 0 : index
    %c3_164 = arith.constant 3 : index
    %c0_165 = arith.constant 0 : index
    %c0_166 = arith.constant 0 : index
    %106 = vector.load %arg2[%c0_161, %c3_162, %c0_163, %c3_164, %c0_165, %c0_166] : memref<1x4x1x4x4x4xf32, #tpu.memory_space<vmem>>, vector<1x1x1x1x4x4xf32>
    %107 = vector.shape_cast %106 : vector<1x1x1x1x4x4xf32> to vector<4x4xf32>
    %108 = arith.truncf %107 : vector<4x4xf32> to vector<4x4xbf16>
    %c3_167 = arith.constant 3 : index
    %c3_168 = arith.constant 3 : index
    %c0_169 = arith.constant 0 : index
    %c0_170 = arith.constant 0 : index
    %109 = vector.load %arg3[%c3_167, %c3_168, %c0_169, %c0_170] : memref<4x4x4x128xbf16, #tpu.memory_space<vmem>>, vector<1x1x4x128xbf16>
    %110 = vector.shape_cast %109 : vector<1x1x4x128xbf16> to vector<4x128xbf16>
    %cst_171 = arith.constant dense<0.000000e+00> : vector<4x128xf32>
    %111 = tpu.matmul %108, %110, %cst_171 {dimension_numbers = #tpu.dot_dimension_numbers<[1], [0], [0], [1], [0, 0, 1, 1], [], []>} : vector<4x4xbf16>, vector<4x128xbf16>, vector<4x128xf32> -> vector<4x128xf32>
    %112 = arith.addf %105, %111 : vector<4x128xf32>
    %c0_172 = arith.constant 0 : index
    %c0_173 = arith.constant 0 : index
    %113 = vector.load %arg4[%c0_172, %c0_173] : memref<1x128xf32, #tpu.memory_space<vmem>>, vector<1x128xf32>
    %114 = vector.broadcast %113 : vector<1x128xf32> to vector<4x128xf32>
    %115 = arith.addf %112, %114 : vector<4x128xf32>
    %c0_174 = arith.constant 0 : index
    %c0_175 = arith.constant 0 : index
    %c0_176 = arith.constant 0 : index
    %c0_177 = arith.constant 0 : index
    %116 = vector.load %arg5[%c0_174, %c0_175, %c0_176, %c0_177] : memref<1x1x4x128xf32, #tpu.memory_space<vmem>>, vector<1x1x4x128xf32>
    %117 = vector.shape_cast %116 : vector<1x1x4x128xf32> to vector<4x128xf32>
    %118 = vector.shape_cast %115 : vector<4x128xf32> to vector<1x1x4x128xf32>
    tpu.vector_store %arg5[%c0_174, %c0_175, %c0_176, %c0_177], %118 {strides = array<i32>} : memref<1x1x4x128xf32, #tpu.memory_space<vmem>>, vector<1x1x4x128xf32>,
    return
  }
  func.func @transform_0(%arg0: i32, %arg1: i32) -> (i32, i32, i32, i32, i32, i32) {
    %c0_i32 = arith.constant 0 : i32
    %c0_i32_0 = arith.constant 0 : i32
    %c0_i32_1 = arith.constant 0 : i32
    %c0_i32_2 = arith.constant 0 : i32
    %c0_i32_3 = arith.constant 0 : i32
    return %arg0, %c0_i32, %arg1, %c0_i32_0, %c0_i32_1, %c0_i32_2 : i32, i32, i32, i32, i32, i32
  }
  func.func @transform_1(%arg0: i32, %arg1: i32) -> (i32, i32, i32, i32) {
    %c0_i32 = arith.constant 0 : i32
    %c0_i32_0 = arith.constant 0 : i32
    %c0_i32_1 = arith.constant 0 : i32
    %c0_i32_2 = arith.constant 0 : i32
    %c0_i32_3 = arith.constant 0 : i32
    return %c0_i32, %c0_i32_0, %c0_i32_1, %c0_i32_2 : i32, i32, i32, i32
  }
  func.func @transform_2(%arg0: i32, %arg1: i32) -> (i32, i32) {
    %c0_i32 = arith.constant 0 : i32
    %c0_i32_0 = arith.constant 0 : i32
    %c0_i32_1 = arith.constant 0 : i32
    return %c0_i32, %c0_i32_0 : i32, i32
  }
  func.func @transform_3(%arg0: i32, %arg1: i32) -> (i32, i32, i32, i32) {
    %c0_i32 = arith.constant 0 : i32
    %c0_i32_0 = arith.constant 0 : i32
    %c0_i32_1 = arith.constant 0 : i32
    return %arg0, %arg1, %c0_i32, %c0_i32_0 : i32, i32, i32, i32
  }
}

</mosaic_0001>

<llo_original>
// kernel: patch_embed.1
$region0: #{patch_embed.1}
  #allocation0 [shape = 'u32[]', space=smem, size = 0x4, offset = 0x4, fixed_abs, tag = 'smem constant byte address 0x4 - core index']
  #allocation1 [shape = 'u32[144,128]{1,0:T(1,128)}', space=vmem, size = 0x12000, scoped, tag = 'internal scratch']
  %s0 = inlined_call_operand.vmem [shape: f32[2,4,4,4,4,4], index: 0, kind: input, shape index: {}]
  %s1 = inlined_call_operand.vmem [shape: bf16[4,4,4,128], index: 1, kind: input, shape index: {}]
  %s2 = inlined_call_operand.vmem [shape: f32[1,128], index: 2, kind: input, shape index: {}]
  %s3 = inlined_call_operand.hbm [shape: f32[2,4,4,128], index: 3, kind: output, shape index: {}]
  %s4 = sld [smem:[#allocation0]]
  $region86: #{patch_embed.1} parent=0
    _
  %s6 = ssub.s32 1, %s4
  %s7 = scalar_select 0, %s6, %s4
  $region1: #{patch_embed.1} parent=0
    #allocation2 [shape = 'u8[65536]{0}', space=vmem, size = 0x10000, scoped, tag = 'input window, operand 0']
    #allocation3 [shape = 'u8[4096]{0}', space=vmem, size = 0x1000, scoped, tag = 'output window, operand 0']
    #allocation4 [shape = 's32[2]{0}', space=sflag, size = 0x8, scoped, tag = 'scoped memory for patch_embed.1']
    %8 = vsyncpa [#allocation4], 0
    %s9 = scalar_lea.sflag [#allocation4], 1
    %10 = vsyncpa %s9, 0
    loop: start=0, step=1, limit=10
    $region2: #{patch_embed.1} parent=1 // loop_pre_header
      _
    $region3: #{patch_embed.1} parent=1 // loop_header
      %s12 = sphi 0, %s16
      %p13 = scmp.ge.s32.totalorder %s12, 10
      %s19 = sphi 0, %s31
      %s20 = sphi 0, %s27
      %s21 = sphi 0, %s19
      %s22 = sphi 0, %s20
      %s23 = sphi 0, %s21
      %s24 = sphi 0, %s22
      %s36 = sphi 0, %s38
      %s39 = sphi 0, %s36
      %s40 = sphi 0, %s39
      %s56 = sphi 0, %s40
      %s60 = sphi 0, %s60
      %s62 = sphi 0, %s60
      %s63 = sphi 0, %s62
      %s77 = sphi 0, %s63
      %s81 = sphi 0, %s81
      %s83 = sphi 0, %s81
      %s84 = sphi 0, %s83
      %s98 = sphi 0, %s84
      %s106 = sphi 0, %s108
      %s109 = sphi 0, %s106
      %s110 = sphi 0, %s109
      %s126 = sphi 0, %s110
    $region4: #{patch_embed.1} parent=1 // loop_header_branch
      %15 = sbr.rel (%p13) target = $region8
    $region5: #{patch_embed.1} parent=1 // loop_body
      %s17 = ssub.s32 %s12, 1
      %s18 = ssub.s32 %s12, 2
      %s25 = sadd.s32 1, %s20
      %p26 = scmp.ge.s32.totalorder %s25, 4
      %s27 = scalar_select %p26, 0, %s25
      %s28 = sadd.s32 1, %s19
      %s29 = scalar_select %p26, %s28, %s19
      %p30 = scmp.ge.s32.totalorder %s29, 2
      %s31 = scalar_select %p30, 0, %s29
      %s32 = ssub.s32 %s19, %s31
      %s33 = ssub.s32 %s20, %s27
      %s34 = sor.u32 %s32, %s33
      %p35 = scmp.eq.s32.totalorder %s34, 0
      %s37 = sadd.s32 %s36, 1
      %s38 = scalar_select %p35, %s36, %s37
      %p41 = pneg %p35
      %p42 = scmp.eq.s32.totalorder %s12, 7
      %p43 = por %p41, %p42
      %p44 = scmp.ne.s32.totalorder %s36, %s39
      %p45 = scmp.eq.s32.totalorder %s12, 0
      %p46 = por %p44, %p45
      %p47 = scmp.ne.s32.totalorder %s36, %s39
      %p48 = scmp.eq.s32.totalorder %s17, 7
      %p49 = por %p47, %p48
      %p50 = scmp.ne.s32.totalorder %s39, %s40
      %p51 = scmp.eq.s32.totalorder %s17, 0
      %p52 = por %p50, %p51
      %p53 = scmp.ne.s32.totalorder %s39, %s40
      %p54 = scmp.eq.s32.totalorder %s18, 7
      %p55 = por %p53, %p54
      %p57 = scmp.ne.s32.totalorder %s40, %s56
      %p58 = scmp.eq.s32.totalorder %s18, 0
      %p59 = por %p57, %p58
      %s61 = sadd.s32 %s60, 1
      %p64 = scmp.eq.s32.totalorder %s12, 7
      %p65 = scmp.ne.s32.totalorder %s60, %s62
      %p66 = scmp.eq.s32.totalorder %s12, 0
      %p67 = por %p65, %p66
      %p68 = scmp.ne.s32.totalorder %s60, %s62
      %p69 = scmp.eq.s32.totalorder %s17, 7
      %p70 = por %p68, %p69
      %p71 = scmp.ne.s32.totalorder %s62, %s63
      %p72 = scmp.eq.s32.totalorder %s17, 0
      %p73 = por %p71, %p72
      %p74 = scmp.ne.s32.totalorder %s62, %s63
      %p75 = scmp.eq.s32.totalorder %s18, 7
      %p76 = por %p74, %p75
      %p78 = scmp.ne.s32.totalorder %s63, %s77
      %p79 = scmp.eq.s32.totalorder %s18, 0
      %p80 = por %p78, %p79
      %s82 = sadd.s32 %s81, 1
      %p85 = scmp.eq.s32.totalorder %s12, 7
      %p86 = scmp.ne.s32.totalorder %s81, %s83
      %p87 = scmp.eq.s32.totalorder %s12, 0
      %p88 = por %p86, %p87
      %p89 = scmp.ne.s32.totalorder %s81, %s83
      %p90 = scmp.eq.s32.totalorder %s17, 7
      %p91 = por %p89, %p90
      %p92 = scmp.ne.s32.totalorder %s83, %s84
      %p93 = scmp.eq.s32.totalorder %s17, 0
      %p94 = por %p92, %p93
      %p95 = scmp.ne.s32.totalorder %s83, %s84
      %p96 = scmp.eq.s32.totalorder %s18, 7
      %p97 = por %p95, %p96
      %p99 = scmp.ne.s32.totalorder %s84, %s98
      %p100 = scmp.eq.s32.totalorder %s18, 0
      %p101 = por %p99, %p100
      %s102 = ssub.s32 %s19, %s31
      %s103 = ssub.s32 %s20, %s27
      %s104 = sor.u32 %s102, %s103
      %p105 = scmp.eq.s32.totalorder %s104, 0
      %s107 = sadd.s32 %s106, 1
      %s108 = scalar_select %p105, %s106, %s107
      %p111 = pneg %p105
      %p112 = scmp.eq.s32.totalorder %s12, 7
      %p113 = por %p111, %p112
      %p114 = scmp.ne.s32.totalorder %s106, %s109
      %p115 = scmp.eq.s32.totalorder %s12, 0
      %p116 = por %p114, %p115
      %p117 = scmp.ne.s32.totalorder %s106, %s109
      %p118 = scmp.eq.s32.totalorder %s17, 7
      %p119 = por %p117, %p118
      %p120 = scmp.ne.s32.totalorder %s109, %s110
      %p121 = scmp.eq.s32.totalorder %s17, 0
      %p122 = por %p120, %p121
      %p123 = scmp.ne.s32.totalorder %s109, %s110
      %p124 = scmp.eq.s32.totalorder %s18, 7
      %p125 = por %p123, %p124
      %p127 = scmp.ne.s32.totalorder %s110, %s126
      %p128 = scmp.eq.s32.totalorder %s18, 0
      %p129 = por %p127, %p128
      %p130 = scmp.le.s32.totalorder 1, %s12
      %p131 = scmp.lt.s32.totalorder %s12, 9
      %p132 = pnand %p130, %p131
      %p133 = pneg %p132
      // Predicated region
      $region9: #{patch_embed.1} parent=5 // pred_check
        _
      $region10: #{patch_embed.1} parent=5 // pred_check_branch
        %135 = sbr.rel (%p132) target = $region12
      $region11: #{patch_embed.1} parent=5 // pred_region
        %s136 = ssub.s32 %s12, 1
        // Predicated region
        $region13: #{patch_embed.1} parent=11 // pred_check
          %p137 = pneg %p73
        $region14: #{patch_embed.1} parent=11 // pred_check_branch
          %139 = sbr.rel (%p137) target = $region16
        $region15: #{patch_embed.1} parent=11 // pred_region
          _
        $region16: #{patch_embed.1} parent=11 // pred_fallthru
          _
        // Predicated region
        $region17: #{patch_embed.1} parent=11 // pred_check
          %p140 = pneg %p94
        $region18: #{patch_embed.1} parent=11 // pred_check_branch
          %142 = sbr.rel (%p140) target = $region20
        $region19: #{patch_embed.1} parent=11 // pred_region
          _
        $region20: #{patch_embed.1} parent=11 // pred_fallthru
          _
      $region12: #{patch_embed.1} parent=5 // pred_fallthru
        _
      %p143 = scmp.lt.s32.totalorder %s12, 8
      // Predicated region
      $region21: #{patch_embed.1} parent=5 // pred_check
        %p144 = pneg %p143
      $region22: #{patch_embed.1} parent=5 // pred_check_branch
        %146 = sbr.rel (%p144) target = $region24
      $region23: #{patch_embed.1} parent=5 // pred_region
        // Predicated region
        $region25: #{patch_embed.1} parent=23 // pred_check
          %p147 = pneg %p46
        $region26: #{patch_embed.1} parent=23 // pred_check_branch
          %149 = sbr.rel (%p147) target = $region28
        $region27: #{patch_embed.1} parent=23 // pred_region
          %s150 = sand.u32 %s36, 1
          %s151 = sand.u32 %s36, 1
          %s152 = smul.addr %s151, 64
          %s153 = scalar_lea.vmem [#allocation2], %s152
          %s154 = smul.addr %s20, 4
          %s155 = smul.addr %s19, 64
          %s156 = sadd.s32 %s154, %s155
          %s157 = smul.addr %s156, 4
          %s158 = scalar_lea.vmem %s0, %s157
          // Predicated region
          $region29: #{patch_embed.1} parent=27 // pred_check
            _
          $region30: #{patch_embed.1} parent=27 // pred_check_branch
            %160 = sbr.rel (0) target = $region32
          $region31: #{patch_embed.1} parent=27 // pred_region
            // Predicated region
            $region33: #{patch_embed.1} parent=31 // pred_check
              _
            $region34: #{patch_embed.1} parent=31 // pred_check_branch
              %162 = sbr.rel target = $region36
            $region35: #{patch_embed.1} parent=31 // pred_region
              // Predicated region
              $region48: #{patch_embed.1} parent=35 // pred_check
                _
              $region49: #{patch_embed.1} parent=35 // pred_check_branch
                %207 = sbr.rel (0) target = $region51
              $region50: #{patch_embed.1} parent=35 // pred_region
                loop: start=0, step=1, limit=1
                $region52: #{patch_embed.1} parent=50 // loop_pre_header
                  _
                $region53: #{patch_embed.1} parent=50 // loop_header
                  %s209 = sphi 0, %s213
                  %p210 = scmp.ge.s32.totalorder %s209, 1
                  %s214 = sphi %s158, %s158
                  %s215 = sphi %s153, %s153
                $region54: #{patch_embed.1} parent=50 // loop_header_branch
                  %212 = sbr.rel (%p210) target = $region58
                $region55: #{patch_embed.1} parent=50 // loop_body
                  _
                $region56: #{patch_embed.1} parent=50 // loop_footer
                  %s213 = sadd.s32 1, %s209
                $region57: #{patch_embed.1} parent=50 // loop_footer_branch
                  %208 = sbr.rel target = $region53
                $region58: #{patch_embed.1} parent=50 // loop_exit
                  _
                loop: start=0, step=1, limit=1
                $region59: #{patch_embed.1} parent=50 // loop_pre_header
                  _
                $region60: #{patch_embed.1} parent=50 // loop_header
                  %s218 = sphi 0, %s222
                  %p219 = scmp.ge.s32.totalorder %s218, 1
                  %s223 = sphi %s158, %s158
                  %s224 = sphi %s153, %s153
                $region61: #{patch_embed.1} parent=50 // loop_header_branch
                  %221 = sbr.rel (%p219) target = $region65
                $region62: #{patch_embed.1} parent=50 // loop_body
                  %v225 = vld [vmem:[%s223] sm:$0xf]
                  %226 = vst [vmem:[%s224] sm:$0xf] %v225
                  %v227 = vld [vmem:[%s223 + $0x4] sm:$0xf]
                  %228 = vst [vmem:[%s224 + $0x4] sm:$0xf] %v227
                  %v229 = vld [vmem:[%s223 + $0x8] sm:$0xf]
                  %230 = vst [vmem:[%s224 + $0x8] sm:$0xf] %v229
                  %v231 = vld [vmem:[%s223 + $0xc] sm:$0xf]
                  %232 = vst [vmem:[%s224 + $0xc] sm:$0xf] %v231
                  %v233 = vld [vmem:[%s223 + $0x40] sm:$0xf]
                  %234 = vst [vmem:[%s224 + $0x10] sm:$0xf] %v233
                  %v235 = vld [vmem:[%s223 + $0x44] sm:$0xf]
                  %236 = vst [vmem:[%s224 + $0x14] sm:$0xf] %v235
                  %v237 = vld [vmem:[%s223 + $0x48] sm:$0xf]
                  %238 = vst [vmem:[%s224 + $0x18] sm:$0xf] %v237
                  %v239 = vld [vmem:[%s223 + $0x4c] sm:$0xf]
                  %240 = vst [vmem:[%s224 + $0x1c] sm:$0xf] %v239
                  %v241 = vld [vmem:[%s223 + $0x80] sm:$0xf]
                  %242 = vst [vmem:[%s224 + $0x20] sm:$0xf] %v241
                  %v243 = vld [vmem:[%s223 + $0x84] sm:$0xf]
                  %244 = vst [vmem:[%s224 + $0x24] sm:$0xf] %v243
                  %v245 = vld [vmem:[%s223 + $0x88] sm:$0xf]
                  %246 = vst [vmem:[%s224 + $0x28] sm:$0xf] %v245
                  %v247 = vld [vmem:[%s223 + $0x8c] sm:$0xf]
                  %248 = vst [vmem:[%s224 + $0x2c] sm:$0xf] %v247
                  %v249 = vld [vmem:[%s223 + $0xc0] sm:$0xf]
                  %250 = vst [vmem:[%s224 + $0x30] sm:$0xf] %v249
                  %v251 = vld [vmem:[%s223 + $0xc4] sm:$0xf]
                  %252 = vst [vmem:[%s224 + $0x34] sm:$0xf] %v251
                  %v253 = vld [vmem:[%s223 + $0xc8] sm:$0xf]
                  %254 = vst [vmem:[%s224 + $0x38] sm:$0xf] %v253
                  %v255 = vld [vmem:[%s223 + $0xcc] sm:$0xf]
                  %256 = vst [vmem:[%s224 + $0x3c] sm:$0xf] %v255
                $region63: #{patch_embed.1} parent=50 // loop_footer
                  %s222 = sadd.s32 1, %s218
                $region64: #{patch_embed.1} parent=50 // loop_footer_branch
                  %217 = sbr.rel target = $region60
                $region65: #{patch_embed.1} parent=50 // loop_exit
                  _
              $region51: #{patch_embed.1} parent=35 // pred_fallthru
                _
            $region36: #{patch_embed.1} parent=31 // pred_fallthru
              _
            // Predicated region
            $region37: #{patch_embed.1} parent=31 // pred_check
              _
            $region38: #{patch_embed.1} parent=31 // pred_check_branch
              %164 = sbr.rel (0) target = $region40
            $region39: #{patch_embed.1} parent=31 // pred_region
              loop: start=0, step=1, limit=1
              $region41: #{patch_embed.1} parent=39 // loop_pre_header
                _
              $region42: #{patch_embed.1} parent=39 // loop_header
                %s167 = sphi 0, %s171
                %p168 = scmp.ge.s32.totalorder %s167, 1
                %s172 = sphi %s158, %s158
                %s173 = sphi %s153, %s153
              $region43: #{patch_embed.1} parent=39 // loop_header_branch
                %170 = sbr.rel (%p168) target = $region47
              $region44: #{patch_embed.1} parent=39 // loop_body
                %v174 = vld [vmem:[%s172] sm:$0xf]
                %175 = vst [vmem:[%s173] sm:$0xf] %v174
                %v176 = vld [vmem:[%s172 + $0x4] sm:$0xf]
                %177 = vst [vmem:[%s173 + $0x4] sm:$0xf] %v176
                %v178 = vld [vmem:[%s172 + $0x8] sm:$0xf]
                %179 = vst [vmem:[%s173 + $0x8] sm:$0xf] %v178
                %v180 = vld [vmem:[%s172 + $0xc] sm:$0xf]
                %181 = vst [vmem:[%s173 + $0xc] sm:$0xf] %v180
                %v182 = vld [vmem:[%s172 + $0x40] sm:$0xf]
                %183 = vst [vmem:[%s173 + $0x10] sm:$0xf] %v182
                %v184 = vld [vmem:[%s172 + $0x44] sm:$0xf]
                %185 = vst [vmem:[%s173 + $0x14] sm:$0xf] %v184
                %v186 = vld [vmem:[%s172 + $0x48] sm:$0xf]
                %187 = vst [vmem:[%s173 + $0x18] sm:$0xf] %v186
                %v188 = vld [vmem:[%s172 + $0x4c] sm:$0xf]
                %189 = vst [vmem:[%s173 + $0x1c] sm:$0xf] %v188
                %v190 = vld [vmem:[%s172 + $0x80] sm:$0xf]
                %191 = vst [vmem:[%s173 + $0x20] sm:$0xf] %v190
                %v192 = vld [vmem:[%s172 + $0x84] sm:$0xf]
                %193 = vst [vmem:[%s173 + $0x24] sm:$0xf] %v192
                %v194 = vld [vmem:[%s172 + $0x88] sm:$0xf]
                %195 = vst [vmem:[%s173 + $0x28] sm:$0xf] %v194
                %v196 = vld [vmem:[%s172 + $0x8c] sm:$0xf]
                %197 = vst [vmem:[%s173 + $0x2c] sm:$0xf] %v196
                %v198 = vld [vmem:[%s172 + $0xc0] sm:$0xf]
                %199 = vst [vmem:[%s173 + $0x30] sm:$0xf] %v198
                %v200 = vld [vmem:[%s172 + $0xc4] sm:$0xf]
                %201 = vst [vmem:[%s173 + $0x34] sm:$0xf] %v200
                %v202 = vld [vmem:[%s172 + $0xc8] sm:$0xf]
                %203 = vst [vmem:[%s173 + $0x38] sm:$0xf] %v202
                %v204 = vld [vmem:[%s172 + $0xcc] sm:$0xf]
                %205 = vst [vmem:[%s173 + $0x3c] sm:$0xf] %v204
              $region45: #{patch_embed.1} parent=39 // loop_footer
                %s171 = sadd.s32 1, %s167
              $region46: #{patch_embed.1} parent=39 // loop_footer_branch
                %166 = sbr.rel target = $region42
              $region47: #{patch_embed.1} parent=39 // loop_exit
                _
            $region40: #{patch_embed.1} parent=31 // pred_fallthru
              _
          $region32: #{patch_embed.1} parent=27 // pred_fallthru
            _
          %257 = vnop
        $region28: #{patch_embed.1} parent=23 // pred_fallthru
          _
      $region24: #{patch_embed.1} parent=5 // pred_fallthru
        _
      %p258 = scmp.le.s32.totalorder 1, %s12
      %p259 = scmp.lt.s32.totalorder %s12, 9
      %p260 = pnand %p258, %p259
      %p261 = pneg %p260
      // Predicated region
      $region66: #{patch_embed.1} parent=5 // pred_check
        _
      $region67: #{patch_embed.1} parent=5 // pred_check_branch
        %263 = sbr.rel (%p260) target = $region69
      $region68: #{patch_embed.1} parent=5 // pred_region
        %s264 = ssub.s32 %s12, 1
        %s265 = sand.u32 %s39, 1
        %s266 = sand.u32 %s39, 1
        %s267 = smul.addr %s266, 64
        %s268 = scalar_lea.vmem [#allocation2], %s267
        // Predicated region
        $region70: #{patch_embed.1} parent=68 // pred_check
          %p269 = pneg %p52
        $region71: #{patch_embed.1} parent=68 // pred_check_branch
          %271 = sbr.rel (%p269) target = $region73
        $region72: #{patch_embed.1} parent=68 // pred_region
          _
        $region73: #{patch_embed.1} parent=68 // pred_fallthru
          _
        %s272 = sand.u32 %s39, 1
        %s273 = sand.u32 %s39, 1
        %s274 = smul.addr %s273, 64
        %s275 = scalar_lea.vmem [#allocation2], %s274
        %p276 = pneg %p52
        %p277 = pneg %p49
        %p278 = pneg %p73
        %p279 = pneg %p70
        %p280 = pneg %p94
        %p281 = pneg %p91
        %p282 = pneg %p122
        %p283 = pneg %p119
        %s284 = sand.u32 %s109, 1
        %s285 = scalar_lea.sflag [#allocation4], %s284
        %s286 = sand.u32 %s109, 1
        %s287 = smul.addr %s286, 4
        %s288 = scalar_lea.vmem [#allocation3], %s287
        %v290 = vld [vmem:[%s268] sm:$0xf]
        %v291 = vpack.c.bf16 %v290, %v290
        %v292 = vld [vmem:[%s1] sm:$0x3]
        %s293 = scalar_lea.vmem %s268, 4 [#allocation2]
        %v294 = vld [vmem:[%s293] sm:$0xf]
        %v295 = vpack.c.bf16 %v294, %v294
        %s296 = scalar_lea.vmem %s1, 2
        %v297 = vld [vmem:[%s296] sm:$0x3]
        %vm298 = vcmask 31744
        %v300 = vsel %vm298, %v295, 0
        %vm302 = vcmask 1041408
        %v304 = vsel %vm302, %v297, 0
        %306 = vmatprep.subr.bf16.mxu0 0
        %307 = vmatpush1.bf16.msra.mxu0 %v304
        %308 = vmatprep.subr.bf16.mxu0 0
        %309 = vmatpush1.bf16.msra.mxu0 0
        %310 = vmatprep.subr.bf16.mxu0 0
        %311 = vmatpush1.bf16.msra.mxu0 0
        %312 = vmatprep.subr.bf16.mxu0 0
        %313 = vmatpush1.bf16.msra.mxu0 0
        %314 = vmatprep.subr.bf16.mxu0 0
        %315 = vmatpush1.bf16.msra.mxu0 0
        %316 = vmatprep.subr.bf16.mxu0 0
        %317 = vmatpush1.bf16.msra.mxu0 0
        %318 = vmatprep.subr.bf16.mxu0 0
        %319 = vmatpush1.bf16.msra.mxu0 0
        %320 = vmatprep.subr.bf16.mxu0 0
        %321 = vmatpush1.bf16.msra.mxu0 0
        %322 = vmatprep.subr.bf16.mxu0 0
        %323 = vmatpush1.bf16.msra.mxu0 0
        %324 = vmatprep.subr.bf16.mxu0 0
        %325 = vmatpush1.bf16.msra.mxu0 0
        %326 = vmatprep.subr.bf16.mxu0 0
        %327 = vmatpush1.bf16.msra.mxu0 0
        %328 = vmatprep.subr.bf16.mxu0 0
        %329 = vmatpush1.bf16.msra.mxu0 0
        %330 = vmatprep.subr.bf16.mxu0 0
        %331 = vmatpush1.bf16.msra.mxu0 0
        %332 = vmatprep.subr.bf16.mxu0 0
        %333 = vmatpush1.bf16.msra.mxu0 0
        %334 = vmatprep.subr.bf16.mxu0 0
        %335 = vmatpush1.bf16.msra.mxu0 0
        %336 = vmatprep.subr.bf16.mxu0 0
        %337 = vmatpush1.bf16.msra.mxu0 0
        %338 = vmatprep.mubr.bf16.mxu0 0
        %339 = vmatmul.mubr.bf16.gmra.mrb[0].mxu0 %v300
        %v340 = vpop.f32.mrb[0].mxu0
        %v341 = vadd.f32 0.0, %v340
        %v342 = vpop.f32.mrb[0].mxu0
        %v343 = vpop.f32.mrb[0].mxu0
        %v344 = vpop.f32.mrb[0].mxu0
        %345 = vdwg.mxu0
        %v347 = vsel %vm298, %v291, 0
        %v350 = vsel %vm302, %v292, 0
        %352 = vmatprep.subr.bf16.mxu0 0
        %353 = vmatpush1.bf16.msra.mxu0 %v350
        %354 = vmatprep.subr.bf16.mxu0 0
        %355 = vmatpush1.bf16.msra.mxu0 0
        %356 = vmatprep.subr.bf16.mxu0 0
        %357 = vmatpush1.bf16.msra.mxu0 0
        %358 = vmatprep.subr.bf16.mxu0 0
        %359 = vmatpush1.bf16.msra.mxu0 0
        %360 = vmatprep.subr.bf16.mxu0 0
        %361 = vmatpush1.bf16.msra.mxu0 0
        %362 = vmatprep.subr.bf16.mxu0 0
        %363 = vmatpush1.bf16.msra.mxu0 0
        %364 = vmatprep.subr.bf16.mxu0 0
        %365 = vmatpush1.bf16.msra.mxu0 0
        %366 = vmatprep.subr.bf16.mxu0 0
        %367 = vmatpush1.bf16.msra.mxu0 0
        %368 = vmatprep.subr.bf16.mxu0 0
        %369 = vmatpush1.bf16.msra.mxu0 0
        %370 = vmatprep.subr.bf16.mxu0 0
        %371 = vmatpush1.bf16.msra.mxu0 0
        %372 = vmatprep.subr.bf16.mxu0 0
        %373 = vmatpush1.bf16.msra.mxu0 0
        %374 = vmatprep.subr.bf16.mxu0 0
        %375 = vmatpush1.bf16.msra.mxu0 0
        %376 = vmatprep.subr.bf16.mxu0 0
        %377 = vmatpush1.bf16.msra.mxu0 0
        %378 = vmatprep.subr.bf16.mxu0 0
        %379 = vmatpush1.bf16.msra.mxu0 0
        %380 = vmatprep.subr.bf16.mxu0 0
        %381 = vmatpush1.bf16.msra.mxu0 0
        %382 = vmatprep.subr.bf16.mxu0 0
        %383 = vmatpush1.bf16.msra.mxu0 0
        %384 = vmatprep.mubr.bf16.mxu0 0
        %385 = vmatmul.mubr.bf16.gmra.mrb[0].mxu0 %v347
        %v386 = vpop.f32.mrb[0].mxu0
        %v387 = vadd.f32 %v341, %v386
        %v388 = vpop.f32.mrb[0].mxu0
        %v389 = vpop.f32.mrb[0].mxu0
        %v390 = vpop.f32.mrb[0].mxu0
        %391 = vdwg.mxu0
        %s392 = scalar_lea.vmem %s268, 8 [#allocation2]
        %v393 = vld [vmem:[%s392] sm:$0xf]
        %v394 = vpack.c.bf16 %v393, %v393
        %s395 = scalar_lea.vmem %s1, 4
        %v396 = vld [vmem:[%s395] sm:$0x3]
        %v398 = vsel %vm298, %v394, 0
        %v401 = vsel %vm302, %v396, 0
        %403 = vmatprep.subr.bf16.mxu0 0
        %404 = vmatpush1.bf16.msra.mxu0 %v401
        %405 = vmatprep.subr.bf16.mxu0 0
        %406 = vmatpush1.bf16.msra.mxu0 0
        %407 = vmatprep.subr.bf16.mxu0 0
        %408 = vmatpush1.bf16.msra.mxu0 0
        %409 = vmatprep.subr.bf16.mxu0 0
        %410 = vmatpush1.bf16.msra.mxu0 0
        %411 = vmatprep.subr.bf16.mxu0 0
        %412 = vmatpush1.bf16.msra.mxu0 0
        %413 = vmatprep.subr.bf16.mxu0 0
        %414 = vmatpush1.bf16.msra.mxu0 0
        %415 = vmatprep.subr.bf16.mxu0 0
        %416 = vmatpush1.bf16.msra.mxu0 0
        %417 = vmatprep.subr.bf16.mxu0 0
        %418 = vmatpush1.bf16.msra.mxu0 0
        %419 = vmatprep.subr.bf16.mxu0 0
        %420 = vmatpush1.bf16.msra.mxu0 0
        %421 = vmatprep.subr.bf16.mxu0 0
        %422 = vmatpush1.bf16.msra.mxu0 0
        %423 = vmatprep.subr.bf16.mxu0 0
        %424 = vmatpush1.bf16.msra.mxu0 0
        %425 = vmatprep.subr.bf16.mxu0 0
        %426 = vmatpush1.bf16.msra.mxu0 0
        %427 = vmatprep.subr.bf16.mxu0 0
        %428 = vmatpush1.bf16.msra.mxu0 0
        %429 = vmatprep.subr.bf16.mxu0 0
        %430 = vmatpush1.bf16.msra.mxu0 0
        %431 = vmatprep.subr.bf16.mxu0 0
        %432 = vmatpush1.bf16.msra.mxu0 0
        %433 = vmatprep.subr.bf16.mxu0 0
        %434 = vmatpush1.bf16.msra.mxu0 0
        %435 = vmatprep.mubr.bf16.mxu0 0
        %436 = vmatmul.mubr.bf16.gmra.mrb[0].mxu0 %v398
        %v437 = vpop.f32.mrb[0].mxu0
        %v438 = vadd.f32 0.0, %v437
        %v439 = vpop.f32.mrb[0].mxu0
        %v440 = vpop.f32.mrb[0].mxu0
        %v441 = vpop.f32.mrb[0].mxu0
        %442 = vdwg.mxu0
        %v443 = vadd.f32 %v387, %v438
        %s444 = scalar_lea.vmem %s268, 12 [#allocation2]
        %v445 = vld [vmem:[%s444] sm:$0xf]
        %v446 = vpack.c.bf16 %v445, %v445
        %s447 = scalar_lea.vmem %s1, 6
        %v448 = vld [vmem:[%s447] sm:$0x3]
        %v450 = vsel %vm298, %v446, 0
        %v453 = vsel %vm302, %v448, 0
        %455 = vmatprep.subr.bf16.mxu0 0
        %456 = vmatpush1.bf16.msra.mxu0 %v453
        %457 = vmatprep.subr.bf16.mxu0 0
        %458 = vmatpush1.bf16.msra.mxu0 0
        %459 = vmatprep.subr.bf16.mxu0 0
        %460 = vmatpush1.bf16.msra.mxu0 0
        %461 = vmatprep.subr.bf16.mxu0 0
        %462 = vmatpush1.bf16.msra.mxu0 0
        %463 = vmatprep.subr.bf16.mxu0 0
        %464 = vmatpush1.bf16.msra.mxu0 0
        %465 = vmatprep.subr.bf16.mxu0 0
        %466 = vmatpush1.bf16.msra.mxu0 0
        %467 = vmatprep.subr.bf16.mxu0 0
        %468 = vmatpush1.bf16.msra.mxu0 0
        %469 = vmatprep.subr.bf16.mxu0 0
        %470 = vmatpush1.bf16.msra.mxu0 0
        %471 = vmatprep.subr.bf16.mxu0 0
        %472 = vmatpush1.bf16.msra.mxu0 0
        %473 = vmatprep.subr.bf16.mxu0 0
        %474 = vmatpush1.bf16.msra.mxu0 0
        %475 = vmatprep.subr.bf16.mxu0 0
        %476 = vmatpush1.bf16.msra.mxu0 0
        %477 = vmatprep.subr.bf16.mxu0 0
        %478 = vmatpush1.bf16.msra.mxu0 0
        %479 = vmatprep.subr.bf16.mxu0 0
        %480 = vmatpush1.bf16.msra.mxu0 0
        %481 = vmatprep.subr.bf16.mxu0 0
        %482 = vmatpush1.bf16.msra.mxu0 0
        %483 = vmatprep.subr.bf16.mxu0 0
        %484 = vmatpush1.bf16.msra.mxu0 0
        %485 = vmatprep.subr.bf16.mxu0 0
        %486 = vmatpush1.bf16.msra.mxu0 0
        %487 = vmatprep.mubr.bf16.mxu0 0
        %488 = vmatmul.mubr.bf16.gmra.mrb[0].mxu0 %v450
        %v489 = vpop.f32.mrb[0].mxu0
        %v490 = vadd.f32 0.0, %v489
        %v491 = vpop.f32.mrb[0].mxu0
        %v492 = vpop.f32.mrb[0].mxu0
        %v493 = vpop.f32.mrb[0].mxu0
        %494 = vdwg.mxu0
        %v495 = vadd.f32 %v443, %v490
        %s496 = scalar_lea.vmem %s268, 16 [#allocation2]
        %v497 = vld [vmem:[%s496] sm:$0xf]
        %v498 = vpack.c.bf16 %v497, %v497
        %s499 = scalar_lea.vmem %s1, 8
        %v500 = vld [vmem:[%s499] sm:$0x3]
        %v502 = vsel %vm298, %v498, 0
        %v505 = vsel %vm302, %v500, 0
        %507 = vmatprep.subr.bf16.mxu0 0
        %508 = vmatpush1.bf16.msra.mxu0 %v505
        %509 = vmatprep.subr.bf16.mxu0 0
        %510 = vmatpush1.bf16.msra.mxu0 0
        %511 = vmatprep.subr.bf16.mxu0 0
        %512 = vmatpush1.bf16.msra.mxu0 0
        %513 = vmatprep.subr.bf16.mxu0 0
        %514 = vmatpush1.bf16.msra.mxu0 0
        %515 = vmatprep.subr.bf16.mxu0 0
        %516 = vmatpush1.bf16.msra.mxu0 0
        %517 = vmatprep.subr.bf16.mxu0 0
        %518 = vmatpush1.bf16.msra.mxu0 0
        %519 = vmatprep.subr.bf16.mxu0 0
        %520 = vmatpush1.bf16.msra.mxu0 0
        %521 = vmatprep.subr.bf16.mxu0 0
        %522 = vmatpush1.bf16.msra.mxu0 0
        %523 = vmatprep.subr.bf16.mxu0 0
        %524 = vmatpush1.bf16.msra.mxu0 0
        %525 = vmatprep.subr.bf16.mxu0 0
        %526 = vmatpush1.bf16.msra.mxu0 0
        %527 = vmatprep.subr.bf16.mxu0 0
        %528 = vmatpush1.bf16.msra.mxu0 0
        %529 = vmatprep.subr.bf16.mxu0 0
        %530 = vmatpush1.bf16.msra.mxu0 0
        %531 = vmatprep.subr.bf16.mxu0 0
        %532 = vmatpush1.bf16.msra.mxu0 0
        %533 = vmatprep.subr.bf16.mxu0 0
        %534 = vmatpush1.bf16.msra.mxu0 0
        %535 = vmatprep.subr.bf16.mxu0 0
        %536 = vmatpush1.bf16.msra.mxu0 0
        %537 = vmatprep.subr.bf16.mxu0 0
        %538 = vmatpush1.bf16.msra.mxu0 0
        %539 = vmatprep.mubr.bf16.mxu0 0
        %540 = vmatmul.mubr.bf16.gmra.mrb[0].mxu0 %v502
        %v541 = vpop.f32.mrb[0].mxu0
        %v542 = vadd.f32 0.0, %v541
        %v543 = vpop.f32.mrb[0].mxu0
        %v544 = vpop.f32.mrb[0].mxu0
        %v545 = vpop.f32.mrb[0].mxu0
        %546 = vdwg.mxu0
        %v547 = vadd.f32 %v495, %v542
        %s548 = scalar_lea.vmem %s268, 20 [#allocation2]
        %v549 = vld [vmem:[%s548] sm:$0xf]
        %v550 = vpack.c.bf16 %v549, %v549
        %s551 = scalar_lea.vmem %s1, 10
        %v552 = vld [vmem:[%s551] sm:$0x3]
        %v554 = vsel %vm298, %v550, 0
        %v557 = vsel %vm302, %v552, 0
        %559 = vmatprep.subr.bf16.mxu0 0
        %560 = vmatpush1.bf16.msra.mxu0 %v557
        %561 = vmatprep.subr.bf16.mxu0 0
        %562 = vmatpush1.bf16.msra.mxu0 0
        %563 = vmatprep.subr.bf16.mxu0 0
        %564 = vmatpush1.bf16.msra.mxu0 0
        %565 = vmatprep.subr.bf16.mxu0 0
        %566 = vmatpush1.bf16.msra.mxu0 0
        %567 = vmatprep.subr.bf16.mxu0 0
        %568 = vmatpush1.bf16.msra.mxu0 0
        %569 = vmatprep.subr.bf16.mxu0 0
        %570 = vmatpush1.bf16.msra.mxu0 0
        %571 = vmatprep.subr.bf16.mxu0 0
        %572 = vmatpush1.bf16.msra.mxu0 0
        %573 = vmatprep.subr.bf16.mxu0 0
        %574 = vmatpush1.bf16.msra.mxu0 0
        %575 = vmatprep.subr.bf16.mxu0 0
        %576 = vmatpush1.bf16.msra.mxu0 0
        %577 = vmatprep.subr.bf16.mxu0 0
        %578 = vmatpush1.bf16.msra.mxu0 0
        %579 = vmatprep.subr.bf16.mxu0 0
        %580 = vmatpush1.bf16.msra.mxu0 0
        %581 = vmatprep.subr.bf16.mxu0 0
        %582 = vmatpush1.bf16.msra.mxu0 0
        %583 = vmatprep.subr.bf16.mxu0 0
        %584 = vmatpush1.bf16.msra.mxu0 0
        %585 = vmatprep.subr.bf16.mxu0 0
        %586 = vmatpush1.bf16.msra.mxu0 0
        %587 = vmatprep.subr.bf16.mxu0 0
        %588 = vmatpush1.bf16.msra.mxu0 0
        %589 = vmatprep.subr.bf16.mxu0 0
        %590 = vmatpush1.bf16.msra.mxu0 0
        %591 = vmatprep.mubr.bf16.mxu0 0
        %592 = vmatmul.mubr.bf16.gmra.mrb[0].mxu0 %v554
        %v593 = vpop.f32.mrb[0].mxu0
        %v594 = vadd.f32 0.0, %v593
        %v595 = vpop.f32.mrb[0].mxu0
        %v596 = vpop.f32.mrb[0].mxu0
        %v597 = vpop.f32.mrb[0].mxu0
        %598 = vdwg.mxu0
        %v599 = vadd.f32 %v547, %v594
        %s600 = scalar_lea.vmem %s268, 24 [#allocation2]
        %v601 = vld [vmem:[%s600] sm:$0xf]
        %v602 = vpack.c.bf16 %v601, %v601
        %s603 = scalar_lea.vmem %s1, 12
        %v604 = vld [vmem:[%s603] sm:$0x3]
        %v606 = vsel %vm298, %v602, 0
        %v609 = vsel %vm302, %v604, 0
        %611 = vmatprep.subr.bf16.mxu0 0
        %612 = vmatpush1.bf16.msra.mxu0 %v609
        %613 = vmatprep.subr.bf16.mxu0 0
        %614 = vmatpush1.bf16.msra.mxu0 0
        %615 = vmatprep.subr.bf16.mxu0 0
        %616 = vmatpush1.bf16.msra.mxu0 0
        %617 = vmatprep.subr.bf16.mxu0 0
        %618 = vmatpush1.bf16.msra.mxu0 0
        %619 = vmatprep.subr.bf16.mxu0 0
        %620 = vmatpush1.bf16.msra.mxu0 0
        %621 = vmatprep.subr.bf16.mxu0 0
        %622 = vmatpush1.bf16.msra.mxu0 0
        %623 = vmatprep.subr.bf16.mxu0 0
        %624 = vmatpush1.bf16.msra.mxu0 0
        %625 = vmatprep.subr.bf16.mxu0 0
        %626 = vmatpush1.bf16.msra.mxu0 0
        %627 = vmatprep.subr.bf16.mxu0 0
        %628 = vmatpush1.bf16.msra.mxu0 0
        %629 = vmatprep.subr.bf16.mxu0 0
        %630 = vmatpush1.bf16.msra.mxu0 0
        %631 = vmatprep.subr.bf16.mxu0 0
        %632 = vmatpush1.bf16.msra.mxu0 0
        %633 = vmatprep.subr.bf16.mxu0 0
        %634 = vmatpush1.bf16.msra.mxu0 0
        %635 = vmatprep.subr.bf16.mxu0 0
        %636 = vmatpush1.bf16.msra.mxu0 0
        %637 = vmatprep.subr.bf16.mxu0 0
        %638 = vmatpush1.bf16.msra.mxu0 0
        %639 = vmatprep.subr.bf16.mxu0 0
        %640 = vmatpush1.bf16.msra.mxu0 0
        %641 = vmatprep.subr.bf16.mxu0 0
        %642 = vmatpush1.bf16.msra.mxu0 0
        %643 = vmatprep.mubr.bf16.mxu0 0
        %644 = vmatmul.mubr.bf16.gmra.mrb[0].mxu0 %v606
        %v645 = vpop.f32.mrb[0].mxu0
        %v646 = vadd.f32 0.0, %v645
        %v647 = vpop.f32.mrb[0].mxu0
        %v648 = vpop.f32.mrb[0].mxu0
        %v649 = vpop.f32.mrb[0].mxu0
        %650 = vdwg.mxu0
        %v651 = vadd.f32 %v599, %v646
        %s652 = scalar_lea.vmem %s268, 28 [#allocation2]
        %v653 = vld [vmem:[%s652] sm:$0xf]
        %v654 = vpack.c.bf16 %v653, %v653
        %s655 = scalar_lea.vmem %s1, 14
        %v656 = vld [vmem:[%s655] sm:$0x3]
        %v658 = vsel %vm298, %v654, 0
        %v661 = vsel %vm302, %v656, 0
        %663 = vmatprep.subr.bf16.mxu0 0
        %664 = vmatpush1.bf16.msra.mxu0 %v661
        %665 = vmatprep.subr.bf16.mxu0 0
        %666 = vmatpush1.bf16.msra.mxu0 0
        %667 = vmatprep.subr.bf16.mxu0 0
        %668 = vmatpush1.bf16.msra.mxu0 0
        %669 = vmatprep.subr.bf16.mxu0 0
        %670 = vmatpush1.bf16.msra.mxu0 0
        %671 = vmatprep.subr.bf16.mxu0 0
        %672 = vmatpush1.bf16.msra.mxu0 0
        %673 = vmatprep.subr.bf16.mxu0 0
        %674 = vmatpush1.bf16.msra.mxu0 0
        %675 = vmatprep.subr.bf16.mxu0 0
        %676 = vmatpush1.bf16.msra.mxu0 0
        %677 = vmatprep.subr.bf16.mxu0 0
        %678 = vmatpush1.bf16.msra.mxu0 0
        %679 = vmatprep.subr.bf16.mxu0 0
        %680 = vmatpush1.bf16.msra.mxu0 0
        %681 = vmatprep.subr.bf16.mxu0 0
        %682 = vmatpush1.bf16.msra.mxu0 0
        %683 = vmatprep.subr.bf16.mxu0 0
        %684 = vmatpush1.bf16.msra.mxu0 0
        %685 = vmatprep.subr.bf16.mxu0 0
        %686 = vmatpush1.bf16.msra.mxu0 0
        %687 = vmatprep.subr.bf16.mxu0 0
        %688 = vmatpush1.bf16.msra.mxu0 0
        %689 = vmatprep.subr.bf16.mxu0 0
        %690 = vmatpush1.bf16.msra.mxu0 0
        %691 = vmatprep.subr.bf16.mxu0 0
        %692 = vmatpush1.bf16.msra.mxu0 0
        %693 = vmatprep.subr.bf16.mxu0 0
        %694 = vmatpush1.bf16.msra.mxu0 0
        %695 = vmatprep.mubr.bf16.mxu0 0
        %696 = vmatmul.mubr.bf16.gmra.mrb[0].mxu0 %v658
        %v697 = vpop.f32.mrb[0].mxu0
        %v698 = vadd.f32 0.0, %v697
        %v699 = vpop.f32.mrb[0].mxu0
        %v700 = vpop.f32.mrb[0].mxu0
        %v701 = vpop.f32.mrb[0].mxu0
        %702 = vdwg.mxu0
        %v703 = vadd.f32 %v651, %v698
        %s704 = scalar_lea.vmem %s268, 32 [#allocation2]
        %v705 = vld [vmem:[%s704] sm:$0xf]
        %v706 = vpack.c.bf16 %v705, %v705
        %s707 = scalar_lea.vmem %s1, 16
        %v708 = vld [vmem:[%s707] sm:$0x3]
        %v710 = vsel %vm298, %v706, 0
        %v713 = vsel %vm302, %v708, 0
        %715 = vmatprep.subr.bf16.mxu0 0
        %716 = vmatpush1.bf16.msra.mxu0 %v713
        %717 = vmatprep.subr.bf16.mxu0 0
        %718 = vmatpush1.bf16.msra.mxu0 0
        %719 = vmatprep.subr.bf16.mxu0 0
        %720 = vmatpush1.bf16.msra.mxu0 0
        %721 = vmatprep.subr.bf16.mxu0 0
        %722 = vmatpush1.bf16.msra.mxu0 0
        %723 = vmatprep.subr.bf16.mxu0 0
        %724 = vmatpush1.bf16.msra.mxu0 0
        %725 = vmatprep.subr.bf16.mxu0 0
        %726 = vmatpush1.bf16.msra.mxu0 0
        %727 = vmatprep.subr.bf16.mxu0 0
        %728 = vmatpush1.bf16.msra.mxu0 0
        %729 = vmatprep.subr.bf16.mxu0 0
        %730 = vmatpush1.bf16.msra.mxu0 0
        %731 = vmatprep.subr.bf16.mxu0 0
        %732 = vmatpush1.bf16.msra.mxu0 0
        %733 = vmatprep.subr.bf16.mxu0 0
        %734 = vmatpush1.bf16.msra.mxu0 0
        %735 = vmatprep.subr.bf16.mxu0 0
        %736 = vmatpush1.bf16.msra.mxu0 0
        %737 = vmatprep.subr.bf16.mxu0 0
        %738 = vmatpush1.bf16.msra.mxu0 0
        %739 = vmatprep.subr.bf16.mxu0 0
        %740 = vmatpush1.bf16.msra.mxu0 0
        %741 = vmatprep.subr.bf16.mxu0 0
        %742 = vmatpush1.bf16.msra.mxu0 0
        %743 = vmatprep.subr.bf16.mxu0 0
        %744 = vmatpush1.bf16.msra.mxu0 0
        %745 = vmatprep.subr.bf16.mxu0 0
        %746 = vmatpush1.bf16.msra.mxu0 0
        %747 = vmatprep.mubr.bf16.mxu0 0
        %748 = vmatmul.mubr.bf16.gmra.mrb[0].mxu0 %v710
        %v749 = vpop.f32.mrb[0].mxu0
        %v750 = vadd.f32 0.0, %v749
        %v751 = vpop.f32.mrb[0].mxu0
        %v752 = vpop.f32.mrb[0].mxu0
        %v753 = vpop.f32.mrb[0].mxu0
        %754 = vdwg.mxu0
        %v755 = vadd.f32 %v703, %v750
        %s756 = scalar_lea.vmem %s268, 36 [#allocation2]
        %v757 = vld [vmem:[%s756] sm:$0xf]
        %v758 = vpack.c.bf16 %v757, %v757
        %s759 = scalar_lea.vmem %s1, 18
        %v760 = vld [vmem:[%s759] sm:$0x3]
        %v762 = vsel %vm298, %v758, 0
        %v765 = vsel %vm302, %v760, 0
        %767 = vmatprep.subr.bf16.mxu0 0
        %768 = vmatpush1.bf16.msra.mxu0 %v765
        %769 = vmatprep.subr.bf16.mxu0 0
        %770 = vmatpush1.bf16.msra.mxu0 0
        %771 = vmatprep.subr.bf16.mxu0 0
        %772 = vmatpush1.bf16.msra.mxu0 0
        %773 = vmatprep.subr.bf16.mxu0 0
        %774 = vmatpush1.bf16.msra.mxu0 0
        %775 = vmatprep.subr.bf16.mxu0 0
        %776 = vmatpush1.bf16.msra.mxu0 0
        %777 = vmatprep.subr.bf16.mxu0 0
        %778 = vmatpush1.bf16.msra.mxu0 0
        %779 = vmatprep.subr.bf16.mxu0 0
        %780 = vmatpush1.bf16.msra.mxu0 0
        %781 = vmatprep.subr.bf16.mxu0 0
        %782 = vmatpush1.bf16.msra.mxu0 0
        %783 = vmatprep.subr.bf16.mxu0 0
        %784 = vmatpush1.bf16.msra.mxu0 0
        %785 = vmatprep.subr.bf16.mxu0 0
        %786 = vmatpush1.bf16.msra.mxu0 0
        %787 = vmatprep.subr.bf16.mxu0 0
        %788 = vmatpush1.bf16.msra.mxu0 0
        %789 = vmatprep.subr.bf16.mxu0 0
        %790 = vmatpush1.bf16.msra.mxu0 0
        %791 = vmatprep.subr.bf16.mxu0 0
        %792 = vmatpush1.bf16.msra.mxu0 0
        %793 = vmatprep.subr.bf16.mxu0 0
        %794 = vmatpush1.bf16.msra.mxu0 0
        %795 = vmatprep.subr.bf16.mxu0 0
        %796 = vmatpush1.bf16.msra.mxu0 0
        %797 = vmatprep.subr.bf16.mxu0 0
        %798 = vmatpush1.bf16.msra.mxu0 0
        %799 = vmatprep.mubr.bf16.mxu0 0
        %800 = vmatmul.mubr.bf16.gmra.mrb[0].mxu0 %v762
        %v801 = vpop.f32.mrb[0].mxu0
        %v802 = vadd.f32 0.0, %v801
        %v803 = vpop.f32.mrb[0].mxu0
        %v804 = vpop.f32.mrb[0].mxu0
        %v805 = vpop.f32.mrb[0].mxu0
        %806 = vdwg.mxu0
        %v807 = vadd.f32 %v755, %v802
        %s808 = scalar_lea.vmem %s268, 40 [#allocation2]
        %v809 = vld [vmem:[%s808] sm:$0xf]
        %v810 = vpack.c.bf16 %v809, %v809
        %s811 = scalar_lea.vmem %s1, 20
        %v812 = vld [vmem:[%s811] sm:$0x3]
        %v814 = vsel %vm298, %v810, 0
        %v817 = vsel %vm302, %v812, 0
        %819 = vmatprep.subr.bf16.mxu0 0
        %820 = vmatpush1.bf16.msra.mxu0 %v817
        %821 = vmatprep.subr.bf16.mxu0 0
        %822 = vmatpush1.bf16.msra.mxu0 0
        %823 = vmatprep.subr.bf16.mxu0 0
        %824 = vmatpush1.bf16.msra.mxu0 0
        %825 = vmatprep.subr.bf16.mxu0 0
        %826 = vmatpush1.bf16.msra.mxu0 0
        %827 = vmatprep.subr.bf16.mxu0 0
        %828 = vmatpush1.bf16.msra.mxu0 0
        %829 = vmatprep.subr.bf16.mxu0 0
        %830 = vmatpush1.bf16.msra.mxu0 0
        %831 = vmatprep.subr.bf16.mxu0 0
        %832 = vmatpush1.bf16.msra.mxu0 0
        %833 = vmatprep.subr.bf16.mxu0 0
        %834 = vmatpush1.bf16.msra.mxu0 0
        %835 = vmatprep.subr.bf16.mxu0 0
        %836 = vmatpush1.bf16.msra.mxu0 0
        %837 = vmatprep.subr.bf16.mxu0 0
        %838 = vmatpush1.bf16.msra.mxu0 0
        %839 = vmatprep.subr.bf16.mxu0 0
        %840 = vmatpush1.bf16.msra.mxu0 0
        %841 = vmatprep.subr.bf16.mxu0 0
        %842 = vmatpush1.bf16.msra.mxu0 0
        %843 = vmatprep.subr.bf16.mxu0 0
        %844 = vmatpush1.bf16.msra.mxu0 0
        %845 = vmatprep.subr.bf16.mxu0 0
        %846 = vmatpush1.bf16.msra.mxu0 0
        %847 = vmatprep.subr.bf16.mxu0 0
        %848 = vmatpush1.bf16.msra.mxu0 0
        %849 = vmatprep.subr.bf16.mxu0 0
        %850 = vmatpush1.bf16.msra.mxu0 0
        %851 = vmatprep.mubr.bf16.mxu0 0
        %852 = vmatmul.mubr.bf16.gmra.mrb[0].mxu0 %v814
        %v853 = vpop.f32.mrb[0].mxu0
        %v854 = vadd.f32 0.0, %v853
        %v855 = vpop.f32.mrb[0].mxu0
        %v856 = vpop.f32.mrb[0].mxu0
        %v857 = vpop.f32.mrb[0].mxu0
        %858 = vdwg.mxu0
        %v859 = vadd.f32 %v807, %v854
        %s860 = scalar_lea.vmem %s268, 44 [#allocation2]
        %v861 = vld [vmem:[%s860] sm:$0xf]
        %v862 = vpack.c.bf16 %v861, %v861
        %s863 = scalar_lea.vmem %s1, 22
        %v864 = vld [vmem:[%s863] sm:$0x3]
        %v866 = vsel %vm298, %v862, 0
        %v869 = vsel %vm302, %v864, 0
        %871 = vmatprep.subr.bf16.mxu0 0
        %872 = vmatpush1.bf16.msra.mxu0 %v869
        %873 = vmatprep.subr.bf16.mxu0 0
        %874 = vmatpush1.bf16.msra.mxu0 0
        %875 = vmatprep.subr.bf16.mxu0 0
        %876 = vmatpush1.bf16.msra.mxu0 0
        %877 = vmatprep.subr.bf16.mxu0 0
        %878 = vmatpush1.bf16.msra.mxu0 0
        %879 = vmatprep.subr.bf16.mxu0 0
        %880 = vmatpush1.bf16.msra.mxu0 0
        %881 = vmatprep.subr.bf16.mxu0 0
        %882 = vmatpush1.bf16.msra.mxu0 0
        %883 = vmatprep.subr.bf16.mxu0 0
        %884 = vmatpush1.bf16.msra.mxu0 0
        %885 = vmatprep.subr.bf16.mxu0 0
        %886 = vmatpush1.bf16.msra.mxu0 0
        %887 = vmatprep.subr.bf16.mxu0 0
        %888 = vmatpush1.bf16.msra.mxu0 0
        %889 = vmatprep.subr.bf16.mxu0 0
        %890 = vmatpush1.bf16.msra.mxu0 0
        %891 = vmatprep.subr.bf16.mxu0 0
        %892 = vmatpush1.bf16.msra.mxu0 0
        %893 = vmatprep.subr.bf16.mxu0 0
        %894 = vmatpush1.bf16.msra.mxu0 0
        %895 = vmatprep.subr.bf16.mxu0 0
        %896 = vmatpush1.bf16.msra.mxu0 0
        %897 = vmatprep.subr.bf16.mxu0 0
        %898 = vmatpush1.bf16.msra.mxu0 0
        %899 = vmatprep.subr.bf16.mxu0 0
        %900 = vmatpush1.bf16.msra.mxu0 0
        %901 = vmatprep.subr.bf16.mxu0 0
        %902 = vmatpush1.bf16.msra.mxu0 0
        %903 = vmatprep.mubr.bf16.mxu0 0
        %904 = vmatmul.mubr.bf16.gmra.mrb[0].mxu0 %v866
        %v905 = vpop.f32.mrb[0].mxu0
        %v906 = vadd.f32 0.0, %v905
        %v907 = vpop.f32.mrb[0].mxu0
        %v908 = vpop.f32.mrb[0].mxu0
        %v909 = vpop.f32.mrb[0].mxu0
        %910 = vdwg.mxu0
        %v911 = vadd.f32 %v859, %v906
        %s912 = scalar_lea.vmem %s268, 48 [#allocation2]
        %v913 = vld [vmem:[%s912] sm:$0xf]
        %v914 = vpack.c.bf16 %v913, %v913
        %s915 = scalar_lea.vmem %s1, 24
        %v916 = vld [vmem:[%s915] sm:$0x3]
        %v918 = vsel %vm298, %v914, 0
        %v921 = vsel %vm302, %v916, 0
        %923 = vmatprep.subr.bf16.mxu0 0
        %924 = vmatpush1.bf16.msra.mxu0 %v921
        %925 = vmatprep.subr.bf16.mxu0 0
        %926 = vmatpush1.bf16.msra.mxu0 0
        %927 = vmatprep.subr.bf16.mxu0 0
        %928 = vmatpush1.bf16.msra.mxu0 0
        %929 = vmatprep.subr.bf16.mxu0 0
        %930 = vmatpush1.bf16.msra.mxu0 0
        %931 = vmatprep.subr.bf16.mxu0 0
        %932 = vmatpush1.bf16.msra.mxu0 0
        %933 = vmatprep.subr.bf16.mxu0 0
        %934 = vmatpush1.bf16.msra.mxu0 0
        %935 = vmatprep.subr.bf16.mxu0 0
        %936 = vmatpush1.bf16.msra.mxu0 0
        %937 = vmatprep.subr.bf16.mxu0 0
        %938 = vmatpush1.bf16.msra.mxu0 0
        %939 = vmatprep.subr.bf16.mxu0 0
        %940 = vmatpush1.bf16.msra.mxu0 0
        %941 = vmatprep.subr.bf16.mxu0 0
        %942 = vmatpush1.bf16.msra.mxu0 0
        %943 = vmatprep.subr.bf16.mxu0 0
        %944 = vmatpush1.bf16.msra.mxu0 0
        %945 = vmatprep.subr.bf16.mxu0 0
        %946 = vmatpush1.bf16.msra.mxu0 0
        %947 = vmatprep.subr.bf16.mxu0 0
        %948 = vmatpush1.bf16.msra.mxu0 0
        %949 = vmatprep.subr.bf16.mxu0 0
        %950 = vmatpush1.bf16.msra.mxu0 0
        %951 = vmatprep.subr.bf16.mxu0 0
        %952 = vmatpush1.bf16.msra.mxu0 0
        %953 = vmatprep.subr.bf16.mxu0 0
        %954 = vmatpush1.bf16.msra.mxu0 0
        %955 = vmatprep.mubr.bf16.mxu0 0
        %956 = vmatmul.mubr.bf16.gmra.mrb[0].mxu0 %v918
        %v957 = vpop.f32.mrb[0].mxu0
        %v958 = vadd.f32 0.0, %v957
        %v959 = vpop.f32.mrb[0].mxu0
        %v960 = vpop.f32.mrb[0].mxu0
        %v961 = vpop.f32.mrb[0].mxu0
        %962 = vdwg.mxu0
        %v963 = vadd.f32 %v911, %v958
        %s964 = scalar_lea.vmem %s268, 52 [#allocation2]
        %v965 = vld [vmem:[%s964] sm:$0xf]
        %v966 = vpack.c.bf16 %v965, %v965
        %s967 = scalar_lea.vmem %s1, 26
        %v968 = vld [vmem:[%s967] sm:$0x3]
        %v970 = vsel %vm298, %v966, 0
        %v973 = vsel %vm302, %v968, 0
        %975 = vmatprep.subr.bf16.mxu0 0
        %976 = vmatpush1.bf16.msra.mxu0 %v973
        %977 = vmatprep.subr.bf16.mxu0 0
        %978 = vmatpush1.bf16.msra.mxu0 0
        %979 = vmatprep.subr.bf16.mxu0 0
        %980 = vmatpush1.bf16.msra.mxu0 0
        %981 = vmatprep.subr.bf16.mxu0 0
        %982 = vmatpush1.bf16.msra.mxu0 0
        %983 = vmatprep.subr.bf16.mxu0 0
        %984 = vmatpush1.bf16.msra.mxu0 0
        %985 = vmatprep.subr.bf16.mxu0 0
        %986 = vmatpush1.bf16.msra.mxu0 0
        %987 = vmatprep.subr.bf16.mxu0 0
        %988 = vmatpush1.bf16.msra.mxu0 0
        %989 = vmatprep.subr.bf16.mxu0 0
        %990 = vmatpush1.bf16.msra.mxu0 0
        %991 = vmatprep.subr.bf16.mxu0 0
        %992 = vmatpush1.bf16.msra.mxu0 0
        %993 = vmatprep.subr.bf16.mxu0 0
        %994 = vmatpush1.bf16.msra.mxu0 0
        %995 = vmatprep.subr.bf16.mxu0 0
        %996 = vmatpush1.bf16.msra.mxu0 0
        %997 = vmatprep.subr.bf16.mxu0 0
        %998 = vmatpush1.bf16.msra.mxu0 0
        %999 = vmatprep.subr.bf16.mxu0 0
        %1000 = vmatpush1.bf16.msra.mxu0 0
        %1001 = vmatprep.subr.bf16.mxu0 0
        %1002 = vmatpush1.bf16.msra.mxu0 0
        %1003 = vmatprep.subr.bf16.mxu0 0
        %1004 = vmatpush1.bf16.msra.mxu0 0
        %1005 = vmatprep.subr.bf16.mxu0 0
        %1006 = vmatpush1.bf16.msra.mxu0 0
        %1007 = vmatprep.mubr.bf16.mxu0 0
        %1008 = vmatmul.mubr.bf16.gmra.mrb[0].mxu0 %v970
        %v1009 = vpop.f32.mrb[0].mxu0
        %v1010 = vadd.f32 0.0, %v1009
        %v1011 = vpop.f32.mrb[0].mxu0
        %v1012 = vpop.f32.mrb[0].mxu0
        %v1013 = vpop.f32.mrb[0].mxu0
        %1014 = vdwg.mxu0
        %v1015 = vadd.f32 %v963, %v1010
        %s1016 = scalar_lea.vmem %s268, 56 [#allocation2]
        %v1017 = vld [vmem:[%s1016] sm:$0xf]
        %v1018 = vpack.c.bf16 %v1017, %v1017
        %s1019 = scalar_lea.vmem %s1, 28
        %v1020 = vld [vmem:[%s1019] sm:$0x3]
        %v1022 = vsel %vm298, %v1018, 0
        %v1025 = vsel %vm302, %v1020, 0
        %1027 = vmatprep.subr.bf16.mxu0 0
        %1028 = vmatpush1.bf16.msra.mxu0 %v1025
        %1029 = vmatprep.subr.bf16.mxu0 0
        %1030 = vmatpush1.bf16.msra.mxu0 0
        %1031 = vmatprep.subr.bf16.mxu0 0
        %1032 = vmatpush1.bf16.msra.mxu0 0
        %1033 = vmatprep.subr.bf16.mxu0 0
        %1034 = vmatpush1.bf16.msra.mxu0 0
        %1035 = vmatprep.subr.bf16.mxu0 0
        %1036 = vmatpush1.bf16.msra.mxu0 0
        %1037 = vmatprep.subr.bf16.mxu0 0
        %1038 = vmatpush1.bf16.msra.mxu0 0
        %1039 = vmatprep.subr.bf16.mxu0 0
        %1040 = vmatpush1.bf16.msra.mxu0 0
        %1041 = vmatprep.subr.bf16.mxu0 0
        %1042 = vmatpush1.bf16.msra.mxu0 0
        %1043 = vmatprep.subr.bf16.mxu0 0
        %1044 = vmatpush1.bf16.msra.mxu0 0
        %1045 = vmatprep.subr.bf16.mxu0 0
        %1046 = vmatpush1.bf16.msra.mxu0 0
        %1047 = vmatprep.subr.bf16.mxu0 0
        %1048 = vmatpush1.bf16.msra.mxu0 0
        %1049 = vmatprep.subr.bf16.mxu0 0
        %1050 = vmatpush1.bf16.msra.mxu0 0
        %1051 = vmatprep.subr.bf16.mxu0 0
        %1052 = vmatpush1.bf16.msra.mxu0 0
        %1053 = vmatprep.subr.bf16.mxu0 0
        %1054 = vmatpush1.bf16.msra.mxu0 0
        %1055 = vmatprep.subr.bf16.mxu0 0
        %1056 = vmatpush1.bf16.msra.mxu0 0
        %1057 = vmatprep.subr.bf16.mxu0 0
        %1058 = vmatpush1.bf16.msra.mxu0 0
        %1059 = vmatprep.mubr.bf16.mxu0 0
        %1060 = vmatmul.mubr.bf16.gmra.mrb[0].mxu0 %v1022
        %v1061 = vpop.f32.mrb[0].mxu0
        %v1062 = vadd.f32 0.0, %v1061
        %v1063 = vpop.f32.mrb[0].mxu0
        %v1064 = vpop.f32.mrb[0].mxu0
        %v1065 = vpop.f32.mrb[0].mxu0
        %1066 = vdwg.mxu0
        %v1067 = vadd.f32 %v1015, %v1062
        %s1068 = scalar_lea.vmem %s268, 60 [#allocation2]
        %v1069 = vld [vmem:[%s1068] sm:$0xf]
        %v1070 = vpack.c.bf16 %v1069, %v1069
        %s1071 = scalar_lea.vmem %s1, 30
        %v1072 = vld [vmem:[%s1071] sm:$0x3]
        %v1074 = vsel %vm298, %v1070, 0
        %v1077 = vsel %vm302, %v1072, 0
        %1079 = vmatprep.subr.bf16.mxu0 0
        %1080 = vmatpush1.bf16.msra.mxu0 %v1077
        %1081 = vmatprep.subr.bf16.mxu0 0
        %1082 = vmatpush1.bf16.msra.mxu0 0
        %1083 = vmatprep.subr.bf16.mxu0 0
        %1084 = vmatpush1.bf16.msra.mxu0 0
        %1085 = vmatprep.subr.bf16.mxu0 0
        %1086 = vmatpush1.bf16.msra.mxu0 0
        %1087 = vmatprep.subr.bf16.mxu0 0
        %1088 = vmatpush1.bf16.msra.mxu0 0
        %1089 = vmatprep.subr.bf16.mxu0 0
        %1090 = vmatpush1.bf16.msra.mxu0 0
        %1091 = vmatprep.subr.bf16.mxu0 0
        %1092 = vmatpush1.bf16.msra.mxu0 0
        %1093 = vmatprep.subr.bf16.mxu0 0
        %1094 = vmatpush1.bf16.msra.mxu0 0
        %1095 = vmatprep.subr.bf16.mxu0 0
        %1096 = vmatpush1.bf16.msra.mxu0 0
        %1097 = vmatprep.subr.bf16.mxu0 0
        %1098 = vmatpush1.bf16.msra.mxu0 0
        %1099 = vmatprep.subr.bf16.mxu0 0
        %1100 = vmatpush1.bf16.msra.mxu0 0
        %1101 = vmatprep.subr.bf16.mxu0 0
        %1102 = vmatpush1.bf16.msra.mxu0 0
        %1103 = vmatprep.subr.bf16.mxu0 0
        %1104 = vmatpush1.bf16.msra.mxu0 0
        %1105 = vmatprep.subr.bf16.mxu0 0
        %1106 = vmatpush1.bf16.msra.mxu0 0
        %1107 = vmatprep.subr.bf16.mxu0 0
        %1108 = vmatpush1.bf16.msra.mxu0 0
        %1109 = vmatprep.subr.bf16.mxu0 0
        %1110 = vmatpush1.bf16.msra.mxu0 0
        %1111 = vmatprep.mubr.bf16.mxu0 0
        %1112 = vmatmul.mubr.bf16.gmra.mrb[0].mxu0 %v1074
        %v1113 = vpop.f32.mrb[0].mxu0
        %v1114 = vadd.f32 0.0, %v1113
        %v1115 = vpop.f32.mrb[0].mxu0
        %v1116 = vpop.f32.mrb[0].mxu0
        %v1117 = vpop.f32.mrb[0].mxu0
        %1118 = vdwg.mxu0
        %v1119 = vadd.f32 %v1067, %v1114
        %v1120 = vld [vmem:[%s2] sm:$0x1]
        %v1122 = vlaneseq
        %v1123 = vshrl.u32 %v1122, 7
        %v1124 = vsub.s32 0, %v1123
        %v1125 = vrot.slane %v1120, %v1124
        %v1127 = vadd.f32 %v1119, %v1125
        %1128 = vst [vmem:[%s288] sm:$0xf] %v1127
        %s1129 = sand.u32 %s109, 1
        %s1130 = scalar_lea.sflag [#allocation4], %s1129
        %s1131 = sand.u32 %s109, 1
        %s1132 = smul.addr %s1131, 4
        %s1133 = scalar_lea.vmem [#allocation3], %s1132
        // Predicated region
        $region74: #{patch_embed.1} parent=68 // pred_check
          %p1134 = pneg %p119
        $region75: #{patch_embed.1} parent=68 // pred_check_branch
          %1136 = sbr.rel (%p1134) target = $region77
        $region76: #{patch_embed.1} parent=68 // pred_region
          %s1138 = ssub.s32 64, 64
          %1139 = vsyncadd %s1130, %s1138
          %s1140 = smul.addr %s21, 4
          %s1141 = sadd.s32 %s22, %s1140
          %s1142 = smul.addr %s1141, 64
          %s1143 = scalar_lea.hbm %s3, %s1142
          %s1145 = sshll.u32 %s1133, 4
          %s1146 = int_to_ptr.vmem [resolvable:$true] %s1145
          %1148 = dma.vmem_to_hbm [thread:$0]  %s1146, 64, %s1143, %s1130
        $region77: #{patch_embed.1} parent=68 // pred_fallthru
          _
      $region69: #{patch_embed.1} parent=5 // pred_fallthru
        _
      %p1149 = scmp.le.s32.totalorder 2, %s12
      // Predicated region
      $region78: #{patch_embed.1} parent=5 // pred_check
        %p1150 = pneg %p1149
      $region79: #{patch_embed.1} parent=5 // pred_check_branch
        %1152 = sbr.rel (%p1150) target = $region81
      $region80: #{patch_embed.1} parent=5 // pred_region
        %s1153 = ssub.s32 %s12, 2
        // Predicated region
        $region82: #{patch_embed.1} parent=80 // pred_check
          %p1154 = pneg %p125
        $region83: #{patch_embed.1} parent=80 // pred_check_branch
          %1156 = sbr.rel (%p1154) target = $region85
        $region84: #{patch_embed.1} parent=80 // pred_region
          %s1157 = sand.u32 %s110, 1
          %s1158 = scalar_lea.sflag [#allocation4], %s1157
          %s1159 = sand.u32 %s110, 1
          %s1160 = smul.addr %s1159, 4
          %s1161 = scalar_lea.vmem [#allocation3], %s1160
          %1162 = dma.done %s1158, 64
        $region85: #{patch_embed.1} parent=80 // pred_fallthru
          _
      $region81: #{patch_embed.1} parent=5 // pred_fallthru
        _
    $region6: #{patch_embed.1} parent=1 // loop_footer
      %s16 = sadd.s32 1, %s12
    $region7: #{patch_embed.1} parent=1 // loop_footer_branch
      %11 = sbr.rel target = $region3
    $region8: #{patch_embed.1} parent=1 // loop_exit
      _
    %1163 = vsyncpa [#allocation4], 1
    %s1164 = scalar_lea.sflag [#allocation4], 1
    %1165 = vsyncpa %s1164, 1

</llo_original>
